<compile_context>
chip_gen: v7x
topology: tpu7x:2x2x1
jax: 0.10.0
libtpu: 0.0.40
codegen_flags: <defaults>
</compile_context>

<pallas_src>
import math

import jax
import jax.numpy as jnp
from jax import lax
from jax.experimental import pallas as pl
from jax.experimental.pallas import tpu as pltpu

D_MODEL = 512
NUM_HEADS = 8
D_K = D_MODEL // NUM_HEADS      # 64
BATCH = 2
SEQ = 10
SCALE = 1.0 / math.sqrt(D_K)


def mhsa_kernel(x_ref, wqkv_ref, bqkv_ref, wout_ref, bout_ref, o_ref,
                acc_ref, xbf_ref, qkv_ref):
    """One grid step == one attention head.

    x_ref:    (B*T, C)       f32   (same block every step; fetched once)
    wqkv_ref: (1, C, 3*d_k)  bf16  (this head's fused q/k/v projection slice)
    bqkv_ref: (1, 1, 3*d_k)  f32
    wout_ref: (1, d_k, C)    bf16  (this head's output-projection slice)
    bout_ref: (1, C)         f32
    o_ref:    (B*T, C)       f32   (written once, on the last head)
    acc_ref:  (B*T, C)       f32   VMEM scratch, persists across heads
    xbf_ref:  (B*T, C)       bf16  VMEM scratch, x cast once at h == 0
    qkv_ref:  (B*T, 3*d_k)   f32   VMEM scratch, per-head fused q/k/v
    """
    h = pl.program_id(0)

    # One-time work on the first head: zero the head-sum accumulator and cast
    # the activations to bf16 once (weights already arrive in bf16).
    @pl.when(h == 0)
    def _init():
        acc_ref[...] = jnp.zeros_like(acc_ref)
        xbf_ref[...] = x_ref[...].astype(jnp.bfloat16)

    x_bf = xbf_ref[...]                       # (B*T, C)     bf16
    wqkv_h = wqkv_ref[0]                      # (C, 3*d_k)   bf16
    wout_h = wout_ref[0]                      # (d_k, C)     bf16

    # Fused per-head q/k/v projection over all B*T rows: one bf16 MXU op with
    # f32 accumulation, staged through a small f32 VMEM scratch so the
    # per-batch row slices below are plain (offset) vector loads.
    qkv_ref[...] = (jnp.dot(x_bf, wqkv_h, preferred_element_type=jnp.float32)
                    + bqkv_ref[0])            # (B*T, 3*d_k) f32

    # Attention core: tiny (T x T) problem, static 2-iteration batch loop.
    for b in range(BATCH):
        r0 = b * SEQ
        # bf16 operands for every MXU op; f32 accumulation throughout.
        q = qkv_ref[r0:r0 + SEQ, 0:D_K].astype(jnp.bfloat16)            # (T, d_k)
        k = qkv_ref[r0:r0 + SEQ, D_K:2 * D_K].astype(jnp.bfloat16)      # (T, d_k)
        v = qkv_ref[r0:r0 + SEQ, 2 * D_K:3 * D_K].astype(jnp.bfloat16)  # (T, d_k)

        # Contract on d_k of both operands -> no materialized k.T transpose.
        s = lax.dot_general(q, k, (((1,), (1,)), ((), ())),
                            preferred_element_type=jnp.float32) * SCALE  # (T, T)

        m = jnp.max(s, axis=-1, keepdims=True)
        p = jnp.exp(s - m)
        w = p * pl.reciprocal(jnp.sum(p, axis=-1, keepdims=True), approx=True)

        head_out = jnp.dot(w.astype(jnp.bfloat16), v,
                           preferred_element_type=jnp.float32)            # (T, d_k)

        # This head's slice of the output projection, accumulated straight into
        # the lane-dense (B*T, C) f32 accumulator (no concat, no relayout).
        acc_ref[r0:r0 + SEQ, :] += jnp.dot(
            head_out.astype(jnp.bfloat16), wout_h,
            preferred_element_type=jnp.float32)                           # (T, C)

    # Single epilogue on the last head: bias add + cast + full-block store.
    @pl.when(h == NUM_HEADS - 1)
    def _finalize():
        o_ref[...] = (acc_ref[...] + bout_ref[...]).astype(o_ref.dtype)


def prepare_params(wqkv, bqkv, wout, bout):
    """One-time conversion of (in_features, out_features)-layout f32 Linear
    params into the persistent storage format the kernel consumes:
    head-major, bf16 weights, f32 biases.  Call once (parameter load time),
    NOT per forward call.
    """
    assert wqkv.shape == (D_MODEL, 3 * D_MODEL), "wqkv must be (in, 3*out) layout"
    assert wout.shape == (D_MODEL, D_MODEL), "wout must be (in, out) layout"
    # qkv output columns are [q | k | v], each split into heads of d_k columns.
    wqkv_hm = (wqkv.reshape(D_MODEL, 3, NUM_HEADS, D_K)
                   .transpose(2, 0, 1, 3)
                   .reshape(NUM_HEADS, D_MODEL, 3 * D_K)
                   .astype(jnp.bfloat16))                                  # (H, C, 3*d_k)
    bqkv_hm = (bqkv.reshape(3, NUM_HEADS, D_K)
                   .transpose(1, 0, 2)
                   .reshape(NUM_HEADS, 1, 3 * D_K)
                   .astype(jnp.float32))                                   # (H, 1, 3*d_k)
    wout_hm = wout.reshape(NUM_HEADS, D_K, D_MODEL).astype(jnp.bfloat16)   # (H, d_k, C)
    bout_2d = bout.reshape(1, D_MODEL).astype(jnp.float32)                 # (1, C)
    return wqkv_hm, bqkv_hm, wout_hm, bout_2d


@jax.jit
def multi_head_self_attention(x, wqkv_hm, bqkv_hm, wout_hm, bout_2d):
    """x: (B, T, C) f32. Weights must already be in the persistent head-major
    bf16 format produced by prepare_params (no per-call weight casts here)."""
    B, T, C = x.shape
    assert (B, T, C) == (BATCH, SEQ, D_MODEL)
    assert wqkv_hm.shape == (NUM_HEADS, D_MODEL, 3 * D_K)
    assert wqkv_hm.dtype == jnp.bfloat16 and wout_hm.dtype == jnp.bfloat16
    BT = B * T

    flops = (2 * BT * C * (3 * C)                    # fused qkv projection
             + 4 * B * NUM_HEADS * T * T * D_K       # q@k.T and probs@v
             + 2 * BT * C * C)                       # output projection
    transcendentals = B * NUM_HEADS * T * T          # exp in softmax
    bytes_accessed = (BT * C * 4                     # x (f32)
                      + NUM_HEADS * C * 3 * D_K * 2  # wqkv (bf16)
                      + NUM_HEADS * 3 * D_K * 4      # bqkv (f32)
                      + NUM_HEADS * D_K * C * 2      # wout (bf16)
                      + C * 4                        # bout (f32)
                      + BT * C * 4)                  # out (f32)

    grid_spec = pltpu.PrefetchScalarGridSpec(
        num_scalar_prefetch=0,
        grid=(NUM_HEADS,),
        in_specs=[
            pl.BlockSpec((BT, C), lambda h: (0, 0)),               # x (fetched once)
            pl.BlockSpec((1, D_MODEL, 3 * D_K), lambda h: (h, 0, 0)),  # per-head wqkv
            pl.BlockSpec((1, 1, 3 * D_K), lambda h: (h, 0, 0)),        # per-head bqkv
            pl.BlockSpec((1, D_K, D_MODEL), lambda h: (h, 0, 0)),      # per-head wout
            pl.BlockSpec((1, D_MODEL), lambda h: (0, 0)),              # bout
        ],
        out_specs=pl.BlockSpec((BT, C), lambda h: (0, 0)),
        scratch_shapes=[
            pltpu.VMEM((BT, D_MODEL), jnp.float32),    # head-sum accumulator
            pltpu.VMEM((BT, D_MODEL), jnp.bfloat16),   # x cast once to bf16
            pltpu.VMEM((BT, 3 * D_K), jnp.float32),    # per-head fused q/k/v
        ],
    )

    out2d = pl.pallas_call(
        mhsa_kernel,
        out_shape=jax.ShapeDtypeStruct((BT, C), x.dtype),
        grid_spec=grid_spec,
        compiler_params=pltpu.CompilerParams(
            dimension_semantics=("arbitrary",)),   # head axis is a reduction
        cost_estimate=pl.CostEstimate(
            flops=flops, transcendentals=transcendentals,
            bytes_accessed=bytes_accessed),
    )(x.reshape(BT, C), wqkv_hm, bqkv_hm, wout_hm, bout_2d)

    return out2d.reshape(B, T, C)


def reference(x, wqkv, bqkv, wout, bout):
    """Pure-JAX reference matching the PyTorch module (weights in (in, out) layout)."""
    B, T, C = x.shape
    qkv = x @ wqkv + bqkv                                   # (B, T, 3C)
    q, k, v = jnp.split(qkv, 3, axis=-1)

    def split_heads(t):
        return t.reshape(B, T, NUM_HEADS, D_K).transpose(0, 2, 1, 3)

    q, k, v = split_heads(q), split_heads(k), split_heads(v)
    s = jnp.einsum("bhqd,bhkd->bhqk", q, k) / math.sqrt(D_K)
    w = jax.nn.softmax(s, axis=-1)
    o = jnp.einsum("bhqk,bhkd->bhqd", w, v)
    o = o.transpose(0, 2, 1, 3).reshape(B, T, C)
    return o @ wout + bout


if __name__ == "__main__":
    key = jax.random.PRNGKey(0)
    kx, k1, k2, k3, k4 = jax.random.split(key, 5)

    # Deterministic synthetic parameters (same shapes/semantics as nn.Linear,
    # stored in (in_features, out_features) layout so y = x @ W + b).
    bound = 1.0 / math.sqrt(D_MODEL)
    x = jax.random.normal(kx, (BATCH, SEQ, D_MODEL), dtype=jnp.float32)
    wqkv = jax.random.uniform(k1, (D_MODEL, 3 * D_MODEL), jnp.float32, -bound, bound)
    bqkv = jax.random.uniform(k2, (3 * D_MODEL,), jnp.float32, -bound, bound)
    wout = jax.random.uniform(k3, (D_MODEL, D_MODEL), jnp.float32, -bound, bound)
    bout = jax.random.uniform(k4, (D_MODEL,), jnp.float32, -bound, bound)

    # One-time parameter preparation (persistent bf16, head-major storage).
    params = prepare_params(wqkv, bqkv, wout, bout)

    out = multi_head_self_attention(x, *params)
    out = jax.block_until_ready(out)

    # Reference computed in f32 on the same bf16-rounded weights/activations the
    # kernel sees; remaining delta = accumulation order, bf16 intermediates and
    # the approx reciprocal in the softmax denominator.
    ref = reference(
        x.astype(jnp.bfloat16).astype(jnp.float32),
        wqkv.astype(jnp.bfloat16).astype(jnp.float32),
        bqkv,
        wout.astype(jnp.bfloat16).astype(jnp.float32),
        bout,
    )

    assert out.shape == (BATCH, SEQ, D_MODEL)
    max_err = jnp.max(jnp.abs(out - ref))
    assert jnp.allclose(out, ref, rtol=2e-2, atol=2e-2), (
        f"mismatch vs reference, max abs err = {max_err}")

    print("KERNEL_OK")
</pallas_src>

<mosaic_0001>
module attributes {stable_mosaic.version = 11 : i64} {
  func.func @mhsa_kernel(%arg0: i32, %arg1: memref<20x512xf32, #tpu.memory_space<vmem>>, %arg2: memref<1x512x192xbf16, #tpu.memory_space<vmem>>, %arg3: memref<1x1x192xf32, #tpu.memory_space<vmem>>, %arg4: memref<1x64x512xbf16, #tpu.memory_space<vmem>>, %arg5: memref<1x512xf32, #tpu.memory_space<vmem>>, %arg6: memref<20x512xf32, #tpu.memory_space<vmem>>, %arg7: memref<20x512xf32, #tpu.memory_space<vmem>>, %arg8: memref<20x512xbf16, #tpu.memory_space<vmem>>, %arg9: memref<20x192xf32, #tpu.memory_space<vmem>>) attributes {dimension_semantics = [#tpu.dimension_semantics<arbitrary>], iteration_bounds = array<i64: 8>, scalar_prefetch = 0 : i64, scratch_operands = 3 : i64, tpu.core_type = #tpu.core_type<tc>, window_params = [{pipeline_mode = #tpu.pipeline_mode<synchronous>, transform_indices = @transform_0, window_bounds = array<i64: 20, 512>}, {transform_indices = @transform_1, window_bounds = array<i64: 1, 512, 192>}, {transform_indices = @transform_2, window_bounds = array<i64: 1, 1, 192>}, {transform_indices = @transform_3, window_bounds = array<i64: 1, 64, 512>}, {pipeline_mode = #tpu.pipeline_mode<synchronous>, transform_indices = @transform_4, window_bounds = array<i64: 1, 512>}, {pipeline_mode = #tpu.pipeline_mode<synchronous>, transform_indices = @transform_5, window_bounds = array<i64: 20, 512>}]} {
    %c0_i32 = arith.constant 0 : i32
    %0 = arith.cmpi eq, %arg0, %c0_i32 : i32
    %1 = arith.extui %0 : i1 to i32
    %c0_i32_0 = arith.constant 0 : i32
    %2 = arith.cmpi ne, %1, %c0_i32_0 : i32
    scf.if %2 {
      %cst_43 = arith.constant 0.000000e+00 : f32
      %69 = vector.broadcast %cst_43 : f32 to vector<20x512xf32>
      %c0_44 = arith.constant 0 : index
      %c0_45 = arith.constant 0 : index
      %70 = vector.load %arg7[%c0_44, %c0_45] : memref<20x512xf32, #tpu.memory_space<vmem>>, vector<20x512xf32>
      tpu.vector_store %arg7[%c0_44, %c0_45], %69 {strides = array<i32>} : memref<20x512xf32, #tpu.memory_space<vmem>>, vector<20x512xf32>,
      %c0_46 = arith.constant 0 : index
      %c0_47 = arith.constant 0 : index
      %71 = vector.load %arg1[%c0_46, %c0_47] : memref<20x512xf32, #tpu.memory_space<vmem>>, vector<20x512xf32>
      %72 = arith.truncf %71 : vector<20x512xf32> to vector<20x512xbf16>
      %c0_48 = arith.constant 0 : index
      %c0_49 = arith.constant 0 : index
      %73 = vector.load %arg8[%c0_48, %c0_49] : memref<20x512xbf16, #tpu.memory_space<vmem>>, vector<20x512xbf16>
      tpu.vector_store %arg8[%c0_48, %c0_49], %72 {strides = array<i32>} : memref<20x512xbf16, #tpu.memory_space<vmem>>, vector<20x512xbf16>,
    } else {
    }
    %c0 = arith.constant 0 : index
    %c0_1 = arith.constant 0 : index
    %3 = vector.load %arg8[%c0, %c0_1] : memref<20x512xbf16, #tpu.memory_space<vmem>>, vector<20x512xbf16>
    %c0_2 = arith.constant 0 : index
    %c0_3 = arith.constant 0 : index
    %c0_4 = arith.constant 0 : index
    %4 = vector.load %arg2[%c0_2, %c0_3, %c0_4] : memref<1x512x192xbf16, #tpu.memory_space<vmem>>, vector<1x512x192xbf16>
    %5 = vector.shape_cast %4 : vector<1x512x192xbf16> to vector<512x192xbf16>
    %c0_5 = arith.constant 0 : index
    %c0_6 = arith.constant 0 : index
    %c0_7 = arith.constant 0 : index
    %6 = vector.load %arg4[%c0_5, %c0_6, %c0_7] : memref<1x64x512xbf16, #tpu.memory_space<vmem>>, vector<1x64x512xbf16>
    %7 = vector.shape_cast %6 : vector<1x64x512xbf16> to vector<64x512xbf16>
    %cst = arith.constant dense<0.000000e+00> : vector<20x192xf32>
    %8 = tpu.matmul %3, %5, %cst {dimension_numbers = #tpu.dot_dimension_numbers<[1], [0], [0], [1], [0, 0, 1, 1], [], []>} : vector<20x512xbf16>, vector<512x192xbf16>, vector<20x192xf32> -> vector<20x192xf32>
    %c0_8 = arith.constant 0 : index
    %c0_9 = arith.constant 0 : index
    %c0_10 = arith.constant 0 : index
    %9 = vector.load %arg3[%c0_8, %c0_9, %c0_10] : memref<1x1x192xf32, #tpu.memory_space<vmem>>, vector<1x1x192xf32>
    %10 = vector.shape_cast %9 : vector<1x1x192xf32> to vector<1x192xf32>
    %11 = vector.broadcast %10 : vector<1x192xf32> to vector<20x192xf32>
    %12 = arith.addf %8, %11 : vector<20x192xf32>
    %c0_11 = arith.constant 0 : index
    %c0_12 = arith.constant 0 : index
    %13 = vector.load %arg9[%c0_11, %c0_12] : memref<20x192xf32, #tpu.memory_space<vmem>>, vector<20x192xf32>
    tpu.vector_store %arg9[%c0_11, %c0_12], %12 {strides = array<i32>} : memref<20x192xf32, #tpu.memory_space<vmem>>, vector<20x192xf32>,
    %c0_13 = arith.constant 0 : index
    %c0_14 = arith.constant 0 : index
    %14 = vector.load %arg9[%c0_13, %c0_14] : memref<20x192xf32, #tpu.memory_space<vmem>>, vector<10x64xf32>
    %15 = arith.truncf %14 : vector<10x64xf32> to vector<10x64xbf16>
    %c0_15 = arith.constant 0 : index
    %c64 = arith.constant 64 : index
    %16 = vector.load %arg9[%c0_15, %c64] : memref<20x192xf32, #tpu.memory_space<vmem>>, vector<10x64xf32>
    %17 = arith.truncf %16 : vector<10x64xf32> to vector<10x64xbf16>
    %c0_16 = arith.constant 0 : index
    %c128 = arith.constant 128 : index
    %18 = vector.load %arg9[%c0_16, %c128] : memref<20x192xf32, #tpu.memory_space<vmem>>, vector<10x64xf32>
    %19 = arith.truncf %18 : vector<10x64xf32> to vector<10x64xbf16>
    %cst_17 = arith.constant dense<0.000000e+00> : vector<10x10xf32>
    %20 = tpu.matmul %15, %17, %cst_17 {dimension_numbers = #tpu.dot_dimension_numbers<[1], [1], [0], [0], [0, 0, 1, 0], [], []>} : vector<10x64xbf16>, vector<10x64xbf16>, vector<10x10xf32> -> vector<10x10xf32>
    %cst_18 = arith.constant 1.250000e-01 : f32
    %21 = vector.broadcast %cst_18 : f32 to vector<10x10xf32>
    %22 = arith.mulf %20, %21 : vector<10x10xf32>
    %cst_19 = arith.constant dense<0xFF800000> : vector<10xf32>
    %23 = vector.multi_reduction <maximumf>, %22, %cst_19 [1] : vector<10x10xf32> to vector<10xf32>
    %24 = vector.shape_cast %23 : vector<10xf32> to vector<10x1xf32>
    %25 = vector.broadcast %24 : vector<10x1xf32> to vector<10x10xf32>
    %26 = arith.subf %22, %25 : vector<10x10xf32>
    %27 = math.exp %26 : vector<10x10xf32>
    %cst_20 = arith.constant dense<0.000000e+00> : vector<10xf32>
    %28 = vector.multi_reduction <add>, %27, %cst_20 [1] : vector<10x10xf32> to vector<10xf32>
    %29 = vector.shape_cast %28 : vector<10xf32> to vector<10x1xf32>
    %30 = tpu.reciprocal %29 {approx = true} : vector<10x1xf32> -> vector<10x1xf32>
    %31 = vector.broadcast %30 : vector<10x1xf32> to vector<10x10xf32>
    %32 = arith.mulf %27, %31 : vector<10x10xf32>
    %33 = arith.truncf %32 : vector<10x10xf32> to vector<10x10xbf16>
    %cst_21 = arith.constant dense<0.000000e+00> : vector<10x64xf32>
    %34 = tpu.matmul %33, %19, %cst_21 {dimension_numbers = #tpu.dot_dimension_numbers<[1], [0], [0], [1], [0, 0, 1, 1], [], []>} : vector<10x10xbf16>, vector<10x64xbf16>, vector<10x64xf32> -> vector<10x64xf32>
    %c0_22 = arith.constant 0 : index
    %c0_23 = arith.constant 0 : index
    %35 = vector.load %arg7[%c0_22, %c0_23] : memref<20x512xf32, #tpu.memory_space<vmem>>, vector<10x512xf32>
    %36 = arith.truncf %34 : vector<10x64xf32> to vector<10x64xbf16>
    %cst_24 = arith.constant dense<0.000000e+00> : vector<10x512xf32>
    %37 = tpu.matmul %36, %7, %cst_24 {dimension_numbers = #tpu.dot_dimension_numbers<[1], [0], [0], [1], [0, 0, 1, 1], [], []>} : vector<10x64xbf16>, vector<64x512xbf16>, vector<10x512xf32> -> vector<10x512xf32>
    %38 = arith.addf %35, %37 : vector<10x512xf32>
    %c0_25 = arith.constant 0 : index
    %c0_26 = arith.constant 0 : index
    %39 = vector.load %arg7[%c0_25, %c0_26] : memref<20x512xf32, #tpu.memory_space<vmem>>, vector<10x512xf32>
    tpu.vector_store %arg7[%c0_25, %c0_26], %38 {strides = array<i32>} : memref<20x512xf32, #tpu.memory_space<vmem>>, vector<10x512xf32>,
    %c10 = arith.constant 10 : index
    %c0_27 = arith.constant 0 : index
    %40 = vector.load %arg9[%c10, %c0_27] : memref<20x192xf32, #tpu.memory_space<vmem>>, vector<10x64xf32>
    %41 = arith.truncf %40 : vector<10x64xf32> to vector<10x64xbf16>
    %c10_28 = arith.constant 10 : index
    %c64_29 = arith.constant 64 : index
    %42 = vector.load %arg9[%c10_28, %c64_29] : memref<20x192xf32, #tpu.memory_space<vmem>>, vector<10x64xf32>
    %43 = arith.truncf %42 : vector<10x64xf32> to vector<10x64xbf16>
    %c10_30 = arith.constant 10 : index
    %c128_31 = arith.constant 128 : index
    %44 = vector.load %arg9[%c10_30, %c128_31] : memref<20x192xf32, #tpu.memory_space<vmem>>, vector<10x64xf32>
    %45 = arith.truncf %44 : vector<10x64xf32> to vector<10x64xbf16>
    %cst_32 = arith.constant dense<0.000000e+00> : vector<10x10xf32>
    %46 = tpu.matmul %41, %43, %cst_32 {dimension_numbers = #tpu.dot_dimension_numbers<[1], [1], [0], [0], [0, 0, 1, 0], [], []>} : vector<10x64xbf16>, vector<10x64xbf16>, vector<10x10xf32> -> vector<10x10xf32>
    %cst_33 = arith.constant 1.250000e-01 : f32
    %47 = vector.broadcast %cst_33 : f32 to vector<10x10xf32>
    %48 = arith.mulf %46, %47 : vector<10x10xf32>
    %cst_34 = arith.constant dense<0xFF800000> : vector<10xf32>
    %49 = vector.multi_reduction <maximumf>, %48, %cst_34 [1] : vector<10x10xf32> to vector<10xf32>
    %50 = vector.shape_cast %49 : vector<10xf32> to vector<10x1xf32>
    %51 = vector.broadcast %50 : vector<10x1xf32> to vector<10x10xf32>
    %52 = arith.subf %48, %51 : vector<10x10xf32>
    %53 = math.exp %52 : vector<10x10xf32>
    %cst_35 = arith.constant dense<0.000000e+00> : vector<10xf32>
    %54 = vector.multi_reduction <add>, %53, %cst_35 [1] : vector<10x10xf32> to vector<10xf32>
    %55 = vector.shape_cast %54 : vector<10xf32> to vector<10x1xf32>
    %56 = tpu.reciprocal %55 {approx = true} : vector<10x1xf32> -> vector<10x1xf32>
    %57 = vector.broadcast %56 : vector<10x1xf32> to vector<10x10xf32>
    %58 = arith.mulf %53, %57 : vector<10x10xf32>
    %59 = arith.truncf %58 : vector<10x10xf32> to vector<10x10xbf16>
    %cst_36 = arith.constant dense<0.000000e+00> : vector<10x64xf32>
    %60 = tpu.matmul %59, %45, %cst_36 {dimension_numbers = #tpu.dot_dimension_numbers<[1], [0], [0], [1], [0, 0, 1, 1], [], []>} : vector<10x10xbf16>, vector<10x64xbf16>, vector<10x64xf32> -> vector<10x64xf32>
    %c10_37 = arith.constant 10 : index
    %c0_38 = arith.constant 0 : index
    %61 = vector.load %arg7[%c10_37, %c0_38] : memref<20x512xf32, #tpu.memory_space<vmem>>, vector<10x512xf32>
    %62 = arith.truncf %60 : vector<10x64xf32> to vector<10x64xbf16>
    %cst_39 = arith.constant dense<0.000000e+00> : vector<10x512xf32>
    %63 = tpu.matmul %62, %7, %cst_39 {dimension_numbers = #tpu.dot_dimension_numbers<[1], [0], [0], [1], [0, 0, 1, 1], [], []>} : vector<10x64xbf16>, vector<64x512xbf16>, vector<10x512xf32> -> vector<10x512xf32>
    %64 = arith.addf %61, %63 : vector<10x512xf32>
    %c10_40 = arith.constant 10 : index
    %c0_41 = arith.constant 0 : index
    %65 = vector.load %arg7[%c10_40, %c0_41] : memref<20x512xf32, #tpu.memory_space<vmem>>, vector<10x512xf32>
    tpu.vector_store %arg7[%c10_40, %c0_41], %64 {strides = array<i32>} : memref<20x512xf32, #tpu.memory_space<vmem>>, vector<10x512xf32>,
    %c7_i32 = arith.constant 7 : i32
    %66 = arith.cmpi eq, %arg0, %c7_i32 : i32
    %67 = arith.extui %66 : i1 to i32
    %c0_i32_42 = arith.constant 0 : i32
    %68 = arith.cmpi ne, %67, %c0_i32_42 : i32
    scf.if %68 {
      %c0_43 = arith.constant 0 : index
      %c0_44 = arith.constant 0 : index
      %69 = vector.load %arg7[%c0_43, %c0_44] : memref<20x512xf32, #tpu.memory_space<vmem>>, vector<20x512xf32>
      %c0_45 = arith.constant 0 : index
      %c0_46 = arith.constant 0 : index
      %70 = vector.load %arg5[%c0_45, %c0_46] : memref<1x512xf32, #tpu.memory_space<vmem>>, vector<1x512xf32>
      %71 = vector.broadcast %70 : vector<1x512xf32> to vector<20x512xf32>
      %72 = arith.addf %69, %71 : vector<20x512xf32>
      %c0_47 = arith.constant 0 : index
      %c0_48 = arith.constant 0 : index
      %73 = vector.load %arg6[%c0_47, %c0_48] : memref<20x512xf32, #tpu.memory_space<vmem>>, vector<20x512xf32>
      tpu.vector_store %arg6[%c0_47, %c0_48], %72 {strides = array<i32>} : memref<20x512xf32, #tpu.memory_space<vmem>>, vector<20x512xf32>,
    } else {
    }
    return
  }
  func.func @transform_0(%arg0: i32) -> (i32, i32) {
    %c0_i32 = arith.constant 0 : i32
    %c0_i32_0 = arith.constant 0 : i32
    %c0_i32_1 = arith.constant 0 : i32
    return %c0_i32, %c0_i32_0 : i32, i32
  }
  func.func @transform_1(%arg0: i32) -> (i32, i32, i32) {
    %c0_i32 = arith.constant 0 : i32
    %c0_i32_0 = arith.constant 0 : i32
    %c0_i32_1 = arith.constant 0 : i32
    return %arg0, %c0_i32, %c0_i32_0 : i32, i32, i32
  }
  func.func @transform_2(%arg0: i32) -> (i32, i32, i32) {
    %c0_i32 = arith.constant 0 : i32
    %c0_i32_0 = arith.constant 0 : i32
    %c0_i32_1 = arith.constant 0 : i32
    return %arg0, %c0_i32, %c0_i32_0 : i32, i32, i32
  }
  func.func @transform_3(%arg0: i32) -> (i32, i32, i32) {
    %c0_i32 = arith.constant 0 : i32
    %c0_i32_0 = arith.constant 0 : i32
    %c0_i32_1 = arith.constant 0 : i32
    return %arg0, %c0_i32, %c0_i32_0 : i32, i32, i32
  }
  func.func @transform_4(%arg0: i32) -> (i32, i32) {
    %c0_i32 = arith.constant 0 : i32
    %c0_i32_0 = arith.constant 0 : i32
    %c0_i32_1 = arith.constant 0 : i32
    return %c0_i32, %c0_i32_0 : i32, i32
  }
  func.func @transform_5(%arg0: i32) -> (i32, i32) {
    %c0_i32 = arith.constant 0 : i32
    %c0_i32_0 = arith.constant 0 : i32
    %c0_i32_1 = arith.constant 0 : i32
    return %c0_i32, %c0_i32_0 : i32, i32
  }
}

</mosaic_0001>

<llo_original>
// kernel: multi_head_self_attention.1
$region0: #{multi_head_self_attention.1}
  #allocation0 [shape = 'u32[]', space=smem, size = 0x4, offset = 0x4, fixed_abs, tag = 'smem constant byte address 0x4 - core index']
  #allocation1 [shape = 'u32[144,128]{1,0:T(1,128)}', space=vmem, size = 0x12000, scoped, tag = 'internal scratch']
  #allocation2 [shape = 'f32[20,512]{1,0:T(8,128)}', space=vmem, size = 0xc000, scoped, tag = 'scratch operand']
  #allocation3 [shape = 'bf16[20,512]{1,0:T(8,128)(2,1)}', space=vmem, size = 0x6000, scoped, tag = 'scratch operand']
  #allocation4 [shape = 'f32[20,192]{1,0:T(8,128)}', space=vmem, size = 0x6000, scoped, tag = 'scratch operand']
  %s0 = inlined_call_operand.vmem [shape: f32[20,512], index: 0, kind: input, shape index: {}]
  %s1 = inlined_call_operand.vmem [shape: bf16[8,512,192], index: 1, kind: input, shape index: {}]
  %s2 = inlined_call_operand.vmem [shape: f32[8,1,192], index: 2, kind: input, shape index: {}]
  %s3 = inlined_call_operand.vmem [shape: bf16[8,64,512], index: 3, kind: input, shape index: {}]
  %s4 = inlined_call_operand.vmem [shape: f32[1,512], index: 4, kind: input, shape index: {}]
  %s5 = inlined_call_operand.vmem [shape: f32[20,512], index: 5, kind: output, shape index: {}]
  %s6 = sld [smem:[#allocation0]]
  $region61: #{multi_head_self_attention.1} parent=0
    _
  %s8 = ssub.s32 1, %s6
  %s9 = scalar_select 0, %s8, %s6
  loop: start=0, step=1, limit=10
  $region2: #{multi_head_self_attention.1} parent=0 // loop_pre_header
    _
  $region3: #{multi_head_self_attention.1} parent=0 // loop_header
    %s11 = sphi 0, %s15
    %p12 = scmp.ge.s32.totalorder %s11, 10
    %s19 = sphi 0, %s19
    %s21 = sphi 0, %s19
    %s22 = sphi 0, %s21
    %s36 = sphi 0, %s22
    %s42 = sphi 0, %s44
    %s45 = sphi 0, %s42
    %s46 = sphi 0, %s45
    %s62 = sphi 0, %s46
    %s68 = sphi 0, %s70
    %s71 = sphi 0, %s68
    %s72 = sphi 0, %s71
    %s88 = sphi 0, %s72
    %s94 = sphi 0, %s96
    %s97 = sphi 0, %s94
    %s98 = sphi 0, %s97
    %s114 = sphi 0, %s98
    %s118 = sphi 0, %s118
    %s120 = sphi 0, %s118
    %s121 = sphi 0, %s120
    %s135 = sphi 0, %s121
    %s139 = sphi 0, %s139
    %s141 = sphi 0, %s139
    %s142 = sphi 0, %s141
    %s156 = sphi 0, %s142
  $region4: #{multi_head_self_attention.1} parent=0 // loop_header_branch
    %14 = sbr.rel (%p12) target = $region8
  $region5: #{multi_head_self_attention.1} parent=0 // loop_body
    %s16 = ssub.s32 %s11, 1
    %s17 = ssub.s32 %s11, 2
    %s18 = sadd.s32 %s11, 1
    %s20 = sadd.s32 %s19, 1
    %p23 = scmp.eq.s32.totalorder %s11, 7
    %p24 = scmp.ne.s32.totalorder %s19, %s21
    %p25 = scmp.eq.s32.totalorder %s11, 0
    %p26 = por %p24, %p25
    %p27 = scmp.ne.s32.totalorder %s19, %s21
    %p28 = scmp.eq.s32.totalorder %s16, 7
    %p29 = por %p27, %p28
    %p30 = scmp.ne.s32.totalorder %s21, %s22
    %p31 = scmp.eq.s32.totalorder %s16, 0
    %p32 = por %p30, %p31
    %p33 = scmp.ne.s32.totalorder %s21, %s22
    %p34 = scmp.eq.s32.totalorder %s17, 7
    %p35 = por %p33, %p34
    %p37 = scmp.ne.s32.totalorder %s22, %s36
    %p38 = scmp.eq.s32.totalorder %s17, 0
    %p39 = por %p37, %p38
    %s40 = ssub.s32 %s11, %s18
    %p41 = scmp.eq.s32.totalorder %s40, 0
    %s43 = sadd.s32 %s42, 1
    %s44 = scalar_select %p41, %s42, %s43
    %p47 = pneg %p41
    %p48 = scmp.eq.s32.totalorder %s11, 7
    %p49 = por %p47, %p48
    %p50 = scmp.ne.s32.totalorder %s42, %s45
    %p51 = scmp.eq.s32.totalorder %s11, 0
    %p52 = por %p50, %p51
    %p53 = scmp.ne.s32.totalorder %s42, %s45
    %p54 = scmp.eq.s32.totalorder %s16, 7
    %p55 = por %p53, %p54
    %p56 = scmp.ne.s32.totalorder %s45, %s46
    %p57 = scmp.eq.s32.totalorder %s16, 0
    %p58 = por %p56, %p57
    %p59 = scmp.ne.s32.totalorder %s45, %s46
    %p60 = scmp.eq.s32.totalorder %s17, 7
    %p61 = por %p59, %p60
    %p63 = scmp.ne.s32.totalorder %s46, %s62
    %p64 = scmp.eq.s32.totalorder %s17, 0
    %p65 = por %p63, %p64
    %s66 = ssub.s32 %s11, %s18
    %p67 = scmp.eq.s32.totalorder %s66, 0
    %s69 = sadd.s32 %s68, 1
    %s70 = scalar_select %p67, %s68, %s69
    %p73 = pneg %p67
    %p74 = scmp.eq.s32.totalorder %s11, 7
    %p75 = por %p73, %p74
    %p76 = scmp.ne.s32.totalorder %s68, %s71
    %p77 = scmp.eq.s32.totalorder %s11, 0
    %p78 = por %p76, %p77
    %p79 = scmp.ne.s32.totalorder %s68, %s71
    %p80 = scmp.eq.s32.totalorder %s16, 7
    %p81 = por %p79, %p80
    %p82 = scmp.ne.s32.totalorder %s71, %s72
    %p83 = scmp.eq.s32.totalorder %s16, 0
    %p84 = por %p82, %p83
    %p85 = scmp.ne.s32.totalorder %s71, %s72
    %p86 = scmp.eq.s32.totalorder %s17, 7
    %p87 = por %p85, %p86
    %p89 = scmp.ne.s32.totalorder %s72, %s88
    %p90 = scmp.eq.s32.totalorder %s17, 0
    %p91 = por %p89, %p90
    %s92 = ssub.s32 %s11, %s18
    %p93 = scmp.eq.s32.totalorder %s92, 0
    %s95 = sadd.s32 %s94, 1
    %s96 = scalar_select %p93, %s94, %s95
    %p99 = pneg %p93
    %p100 = scmp.eq.s32.totalorder %s11, 7
    %p101 = por %p99, %p100
    %p102 = scmp.ne.s32.totalorder %s94, %s97
    %p103 = scmp.eq.s32.totalorder %s11, 0
    %p104 = por %p102, %p103
    %p105 = scmp.ne.s32.totalorder %s94, %s97
    %p106 = scmp.eq.s32.totalorder %s16, 7
    %p107 = por %p105, %p106
    %p108 = scmp.ne.s32.totalorder %s97, %s98
    %p109 = scmp.eq.s32.totalorder %s16, 0
    %p110 = por %p108, %p109
    %p111 = scmp.ne.s32.totalorder %s97, %s98
    %p112 = scmp.eq.s32.totalorder %s17, 7
    %p113 = por %p111, %p112
    %p115 = scmp.ne.s32.totalorder %s98, %s114
    %p116 = scmp.eq.s32.totalorder %s17, 0
    %p117 = por %p115, %p116
    %s119 = sadd.s32 %s118, 1
    %p122 = scmp.eq.s32.totalorder %s11, 7
    %p123 = scmp.ne.s32.totalorder %s118, %s120
    %p124 = scmp.eq.s32.totalorder %s11, 0
    %p125 = por %p123, %p124
    %p126 = scmp.ne.s32.totalorder %s118, %s120
    %p127 = scmp.eq.s32.totalorder %s16, 7
    %p128 = por %p126, %p127
    %p129 = scmp.ne.s32.totalorder %s120, %s121
    %p130 = scmp.eq.s32.totalorder %s16, 0
    %p131 = por %p129, %p130
    %p132 = scmp.ne.s32.totalorder %s120, %s121
    %p133 = scmp.eq.s32.totalorder %s17, 7
    %p134 = por %p132, %p133
    %p136 = scmp.ne.s32.totalorder %s121, %s135
    %p137 = scmp.eq.s32.totalorder %s17, 0
    %p138 = por %p136, %p137
    %s140 = sadd.s32 %s139, 1
    %p143 = scmp.eq.s32.totalorder %s11, 7
    %p144 = scmp.ne.s32.totalorder %s139, %s141
    %p145 = scmp.eq.s32.totalorder %s11, 0
    %p146 = por %p144, %p145
    %p147 = scmp.ne.s32.totalorder %s139, %s141
    %p148 = scmp.eq.s32.totalorder %s16, 7
    %p149 = por %p147, %p148
    %p150 = scmp.ne.s32.totalorder %s141, %s142
    %p151 = scmp.eq.s32.totalorder %s16, 0
    %p152 = por %p150, %p151
    %p153 = scmp.ne.s32.totalorder %s141, %s142
    %p154 = scmp.eq.s32.totalorder %s17, 7
    %p155 = por %p153, %p154
    %p157 = scmp.ne.s32.totalorder %s142, %s156
    %p158 = scmp.eq.s32.totalorder %s17, 0
    %p159 = por %p157, %p158
    %p160 = scmp.le.s32.totalorder 1, %s11
    %p161 = scmp.lt.s32.totalorder %s11, 9
    %p162 = pnand %p160, %p161
    %p163 = pneg %p162
    // Predicated region
    $region9: #{multi_head_self_attention.1} parent=5 // pred_check
      _
    $region10: #{multi_head_self_attention.1} parent=5 // pred_check_branch
      %165 = sbr.rel (%p162) target = $region12
    $region11: #{multi_head_self_attention.1} parent=5 // pred_region
      %s166 = ssub.s32 %s11, 1
      // Predicated region
      $region13: #{multi_head_self_attention.1} parent=11 // pred_check
        %p167 = pneg %p32
      $region14: #{multi_head_self_attention.1} parent=11 // pred_check_branch
        %169 = sbr.rel (%p167) target = $region16
      $region15: #{multi_head_self_attention.1} parent=11 // pred_region
        _
      $region16: #{multi_head_self_attention.1} parent=11 // pred_fallthru
        _
      // Predicated region
      $region17: #{multi_head_self_attention.1} parent=11 // pred_check
        %p170 = pneg %p131
      $region18: #{multi_head_self_attention.1} parent=11 // pred_check_branch
        %172 = sbr.rel (%p170) target = $region20
      $region19: #{multi_head_self_attention.1} parent=11 // pred_region
        _
      $region20: #{multi_head_self_attention.1} parent=11 // pred_fallthru
        _
    $region12: #{multi_head_self_attention.1} parent=5 // pred_fallthru
      _
    %p173 = scmp.lt.s32.totalorder %s11, 8
    // Predicated region
    $region21: #{multi_head_self_attention.1} parent=5 // pred_check
      %p174 = pneg %p173
    $region22: #{multi_head_self_attention.1} parent=5 // pred_check_branch
      %176 = sbr.rel (%p174) target = $region24
    $region23: #{multi_head_self_attention.1} parent=5 // pred_region
      // Predicated region
      $region25: #{multi_head_self_attention.1} parent=23 // pred_check
        %p177 = pneg %p52
      $region26: #{multi_head_self_attention.1} parent=23 // pred_check_branch
        %179 = sbr.rel (%p177) target = $region28
      $region27: #{multi_head_self_attention.1} parent=23 // pred_region
        %p180 = scmp.lt.s32.totalorder %s11, 7
        %s181 = scalar_select %p180, %s11, 7
        %s182 = smul.addr %s181, 128
        %s183 = smul.addr %s182, 4
        %s184 = scalar_lea.vmem %s1, %s183
      $region28: #{multi_head_self_attention.1} parent=23 // pred_fallthru
        _
      // Predicated region
      $region29: #{multi_head_self_attention.1} parent=23 // pred_check
        %p185 = pneg %p78
      $region30: #{multi_head_self_attention.1} parent=23 // pred_check_branch
        %187 = sbr.rel (%p185) target = $region32
      $region31: #{multi_head_self_attention.1} parent=23 // pred_region
        %p188 = scmp.lt.s32.totalorder %s11, 7
        %s189 = scalar_select %p188, %s11, 7
        %s190 = smul.addr %s189, 2
        %s191 = scalar_lea.vmem %s2, %s190
      $region32: #{multi_head_self_attention.1} parent=23 // pred_fallthru
        _
      // Predicated region
      $region33: #{multi_head_self_attention.1} parent=23 // pred_check
        %p192 = pneg %p104
      $region34: #{multi_head_self_attention.1} parent=23 // pred_check_branch
        %194 = sbr.rel (%p192) target = $region36
      $region35: #{multi_head_self_attention.1} parent=23 // pred_region
        %p195 = scmp.lt.s32.totalorder %s11, 7
        %s196 = scalar_select %p195, %s11, 7
        %s197 = smul.addr %s196, 32
        %s198 = smul.addr %s197, 4
        %s199 = scalar_lea.vmem %s3, %s198
      $region36: #{multi_head_self_attention.1} parent=23 // pred_fallthru
        _
    $region24: #{multi_head_self_attention.1} parent=5 // pred_fallthru
      _
    %p200 = scmp.le.s32.totalorder 1, %s11
    %p201 = scmp.lt.s32.totalorder %s11, 9
    %p202 = pnand %p200, %p201
    %p203 = pneg %p202
    // Predicated region
    $region37: #{multi_head_self_attention.1} parent=5 // pred_check
      _
    $region38: #{multi_head_self_attention.1} parent=5 // pred_check_branch
      %205 = sbr.rel (%p202) target = $region40
    $region39: #{multi_head_self_attention.1} parent=5 // pred_region
      %s206 = ssub.s32 %s11, 1
      %p207 = pneg %p32
      %p208 = pneg %p29
      %p209 = scmp.lt.s32.totalorder %s16, 7
      %s210 = scalar_select %p209, %s16, 7
      %s211 = smul.addr %s210, 128
      %s212 = smul.addr %s211, 4
      %s213 = scalar_lea.vmem %s1, %s212
      %p214 = pneg %p58
      %p215 = pneg %p55
      %p216 = scmp.lt.s32.totalorder %s16, 7
      %s217 = scalar_select %p216, %s16, 7
      %s218 = smul.addr %s217, 2
      %s219 = scalar_lea.vmem %s2, %s218
      %p220 = pneg %p84
      %p221 = pneg %p81
      %p222 = scmp.lt.s32.totalorder %s16, 7
      %s223 = scalar_select %p222, %s16, 7
      %s224 = smul.addr %s223, 32
      %s225 = smul.addr %s224, 4
      %s226 = scalar_lea.vmem %s3, %s225
      %p227 = pneg %p110
      %p228 = pneg %p107
      %p229 = pneg %p131
      %p230 = pneg %p128
      %p231 = pneg %p152
      %p232 = pneg %p149
      %p233 = scmp.lt.s32.totalorder %s16, 7
      %s234 = scalar_select %p233, %s16, 7
      %s235 = smul.addr %s234, 128
      %s236 = smul.addr %s235, 4
      %s237 = scalar_lea.vmem %s1, %s236
      %p238 = scmp.lt.s32.totalorder %s16, 7
      %s239 = scalar_select %p238, %s16, 7
      %s240 = smul.addr %s239, 2
      %s241 = scalar_lea.vmem %s2, %s240
      %p242 = scmp.lt.s32.totalorder %s16, 7
      %s243 = scalar_select %p242, %s16, 7
      %s244 = smul.addr %s243, 32
      %s245 = smul.addr %s244, 4
      %s246 = scalar_lea.vmem %s3, %s245
      %p248 = scmp.eq.s32.totalorder %s16, 0
      // Predicated region
      $region41: #{multi_head_self_attention.1} parent=39 // pred_check
        %p249 = pneg %p248
      $region42: #{multi_head_self_attention.1} parent=39 // pred_check_branch
        %251 = sbr.rel (%p249) target = $region44
      $region43: #{multi_head_self_attention.1} parent=39 // pred_region
        %252 = vst [vmem:[#allocation2] sm:$0xff] 0.0
        %253 = vst [vmem:[#allocation2 + $0x8] sm:$0xff] 0.0
        %254 = vst [vmem:[#allocation2 + $0x10] sm:$0xff] 0.0
        %255 = vst [vmem:[#allocation2 + $0x18] sm:$0xff] 0.0
        %256 = vst [vmem:[#allocation2 + $0x20] sm:$0xff] 0.0
        %257 = vst [vmem:[#allocation2 + $0x28] sm:$0xff] 0.0
        %258 = vst [vmem:[#allocation2 + $0x30] sm:$0xff] 0.0
        %259 = vst [vmem:[#allocation2 + $0x38] sm:$0xff] 0.0
        %260 = vst [vmem:[#allocation2 + $0x40] sm:$0xf] 0.0
        %261 = vst [vmem:[#allocation2 + $0x48] sm:$0xf] 0.0
        %262 = vst [vmem:[#allocation2 + $0x50] sm:$0xf] 0.0
        %263 = vst [vmem:[#allocation2 + $0x58] sm:$0xf] 0.0
        %v264 = vld [vmem:[%s0] sm:$0xff]
        %v265 = vld [vmem:[%s0 + $0x8] sm:$0xff]
        %v266 = vld [vmem:[%s0 + $0x10] sm:$0xff]
        %v267 = vld [vmem:[%s0 + $0x18] sm:$0xff]
        %v268 = vld [vmem:[%s0 + $0x20] sm:$0xff]
        %v269 = vld [vmem:[%s0 + $0x28] sm:$0xff]
        %v270 = vld [vmem:[%s0 + $0x30] sm:$0xff]
        %v271 = vld [vmem:[%s0 + $0x38] sm:$0xff]
        %v272 = vld [vmem:[%s0 + $0x40] sm:$0xf]
        %v273 = vld [vmem:[%s0 + $0x48] sm:$0xf]
        %v274 = vld [vmem:[%s0 + $0x50] sm:$0xf]
        %v275 = vld [vmem:[%s0 + $0x58] sm:$0xf]
        %v276 = vpack.c.bf16 %v268, %v264
        %v277 = vpack.c.bf16 %v269, %v265
        %v278 = vpack.c.bf16 %v270, %v266
        %v279 = vpack.c.bf16 %v271, %v267
        %v280 = vpack.c.bf16 %v272, %v272
        %v281 = vpack.c.bf16 %v273, %v273
        %v282 = vpack.c.bf16 %v274, %v274
        %v283 = vpack.c.bf16 %v275, %v275
        %v292 = vunpack.c.l.b16 %v276
        %v293 = vunpack.c.l.b16 %v277
        %v294 = vunpack.c.l.b16 %v278
        %v295 = vunpack.c.l.b16 %v279
        %v296 = vunpack.c.h.b16 %v276
        %v297 = vunpack.c.h.b16 %v277
        %v298 = vunpack.c.h.b16 %v278
        %v299 = vunpack.c.h.b16 %v279
        %v300 = vunpack.c.l.b16 %v280
        %v301 = vunpack.c.l.b16 %v281
        %v302 = vunpack.c.l.b16 %v282
        %v303 = vunpack.c.l.b16 %v283
        %v304 = vpack.c.b16 %v293, %v292
        %v305 = vpack.c.b16 %v295, %v294
        %v306 = vpack.c.b16 %v297, %v296
        %v307 = vpack.c.b16 %v299, %v298
        %v308 = vpack.c.b16 %v301, %v300
        %v309 = vpack.c.b16 %v303, %v302
        %316 = vst [vmem:[#allocation3] sm:$0xff] %v304
        %317 = vst [vmem:[#allocation3 + $0x8] sm:$0xff] %v305
        %318 = vst [vmem:[#allocation3 + $0x10] sm:$0xff] %v306
        %319 = vst [vmem:[#allocation3 + $0x18] sm:$0xff] %v307
        %320 = vst [vmem:[#allocation3 + $0x20] sm:$0x33] %v308
        %321 = vst [vmem:[#allocation3 + $0x28] sm:$0x33] %v309
      $region44: #{multi_head_self_attention.1} parent=39 // pred_fallthru
        _
      %v322 = vld [vmem:[#allocation3] sm:$0xff]
      %v323 = vld [vmem:[#allocation3 + $0x8] sm:$0xff]
      %v324 = vld [vmem:[#allocation3 + $0x10] sm:$0xff]
      %v325 = vld [vmem:[#allocation3 + $0x18] sm:$0xff]
      %v326 = vld [vmem:[#allocation3 + $0x20] sm:$0x33]
      %v327 = vld [vmem:[#allocation3 + $0x28] sm:$0x33]
      %v328 = vld [vmem:[%s237] sm:$0xff]
      %v329 = vld [vmem:[%s237 + $0x8] sm:$0xff]
      %v330 = vld [vmem:[%s237 + $0x10] sm:$0xff]
      %v331 = vld [vmem:[%s237 + $0x18] sm:$0xff]
      %v332 = vld [vmem:[%s237 + $0x20] sm:$0xff]
      %v333 = vld [vmem:[%s237 + $0x28] sm:$0xff]
      %v334 = vld [vmem:[%s237 + $0x30] sm:$0xff]
      %v335 = vld [vmem:[%s237 + $0x38] sm:$0xff]
      %v336 = vld [vmem:[%s237 + $0x40] sm:$0xff]
      %v337 = vld [vmem:[%s237 + $0x48] sm:$0xff]
      %v338 = vld [vmem:[%s237 + $0x50] sm:$0xff]
      %v339 = vld [vmem:[%s237 + $0x58] sm:$0xff]
      %v340 = vld [vmem:[%s237 + $0x60] sm:$0xff]
      %v341 = vld [vmem:[%s237 + $0x68] sm:$0xff]
      %v342 = vld [vmem:[%s237 + $0x70] sm:$0xff]
      %v343 = vld [vmem:[%s237 + $0x78] sm:$0xff]
      %v344 = vld [vmem:[%s237 + $0x80] sm:$0xff]
      %v345 = vld [vmem:[%s237 + $0x88] sm:$0xff]
      %v346 = vld [vmem:[%s237 + $0x90] sm:$0xff]
      %v347 = vld [vmem:[%s237 + $0x98] sm:$0xff]
      %v348 = vld [vmem:[%s237 + $0xa0] sm:$0xff]
      %v349 = vld [vmem:[%s237 + $0xa8] sm:$0xff]
      %v350 = vld [vmem:[%s237 + $0xb0] sm:$0xff]
      %v351 = vld [vmem:[%s237 + $0xb8] sm:$0xff]
      %v352 = vld [vmem:[%s237 + $0xc0] sm:$0xff]
      %v353 = vld [vmem:[%s237 + $0xc8] sm:$0xff]
      %v354 = vld [vmem:[%s237 + $0xd0] sm:$0xff]
      %v355 = vld [vmem:[%s237 + $0xd8] sm:$0xff]
      %v356 = vld [vmem:[%s237 + $0xe0] sm:$0xff]
      %v357 = vld [vmem:[%s237 + $0xe8] sm:$0xff]
      %v358 = vld [vmem:[%s237 + $0xf0] sm:$0xff]
      %v359 = vld [vmem:[%s237 + $0xf8] sm:$0xff]
      %v360 = vld [vmem:[%s237 + $0x100] sm:$0xff]
      %v361 = vld [vmem:[%s237 + $0x108] sm:$0xff]
      %v362 = vld [vmem:[%s237 + $0x110] sm:$0xff]
      %v363 = vld [vmem:[%s237 + $0x118] sm:$0xff]
      %v364 = vld [vmem:[%s237 + $0x120] sm:$0xff]
      %v365 = vld [vmem:[%s237 + $0x128] sm:$0xff]
      %v366 = vld [vmem:[%s237 + $0x130] sm:$0xff]
      %v367 = vld [vmem:[%s237 + $0x138] sm:$0xff]
      %v368 = vld [vmem:[%s237 + $0x140] sm:$0xff]
      %v369 = vld [vmem:[%s237 + $0x148] sm:$0xff]
      %v370 = vld [vmem:[%s237 + $0x150] sm:$0xff]
      %v371 = vld [vmem:[%s237 + $0x158] sm:$0xff]
      %v372 = vld [vmem:[%s237 + $0x160] sm:$0xff]
      %v373 = vld [vmem:[%s237 + $0x168] sm:$0xff]
      %v374 = vld [vmem:[%s237 + $0x170] sm:$0xff]
      %v375 = vld [vmem:[%s237 + $0x178] sm:$0xff]
      %v376 = vld [vmem:[%s237 + $0x180] sm:$0xff]
      %v377 = vld [vmem:[%s237 + $0x188] sm:$0xff]
      %v378 = vld [vmem:[%s237 + $0x190] sm:$0xff]
      %v379 = vld [vmem:[%s237 + $0x198] sm:$0xff]
      %v380 = vld [vmem:[%s237 + $0x1a0] sm:$0xff]
      %v381 = vld [vmem:[%s237 + $0x1a8] sm:$0xff]
      %v382 = vld [vmem:[%s237 + $0x1b0] sm:$0xff]
      %v383 = vld [vmem:[%s237 + $0x1b8] sm:$0xff]
      %v384 = vld [vmem:[%s237 + $0x1c0] sm:$0xff]
      %v385 = vld [vmem:[%s237 + $0x1c8] sm:$0xff]
      %v386 = vld [vmem:[%s237 + $0x1d0] sm:$0xff]
      %v387 = vld [vmem:[%s237 + $0x1d8] sm:$0xff]
      %v388 = vld [vmem:[%s237 + $0x1e0] sm:$0xff]
      %v389 = vld [vmem:[%s237 + $0x1e8] sm:$0xff]
      %v390 = vld [vmem:[%s237 + $0x1f0] sm:$0xff]
      %v391 = vld [vmem:[%s237 + $0x1f8] sm:$0xff]
      %v392 = vld [vmem:[%s246] sm:$0xff]
      %v393 = vld [vmem:[%s246 + $0x8] sm:$0xff]
      %v394 = vld [vmem:[%s246 + $0x10] sm:$0xff]
      %v395 = vld [vmem:[%s246 + $0x18] sm:$0xff]
      %v396 = vld [vmem:[%s246 + $0x20] sm:$0xff]
      %v397 = vld [vmem:[%s246 + $0x28] sm:$0xff]
      %v398 = vld [vmem:[%s246 + $0x30] sm:$0xff]
      %v399 = vld [vmem:[%s246 + $0x38] sm:$0xff]
      %v400 = vld [vmem:[%s246 + $0x40] sm:$0xff]
      %v401 = vld [vmem:[%s246 + $0x48] sm:$0xff]
      %v402 = vld [vmem:[%s246 + $0x50] sm:$0xff]
      %v403 = vld [vmem:[%s246 + $0x58] sm:$0xff]
      %v404 = vld [vmem:[%s246 + $0x60] sm:$0xff]
      %v405 = vld [vmem:[%s246 + $0x68] sm:$0xff]
      %v406 = vld [vmem:[%s246 + $0x70] sm:$0xff]
      %v407 = vld [vmem:[%s246 + $0x78] sm:$0xff]
      %v408 = vld [vmem:[%s241] sm:$0x3]
      %v410 = vlaneseq
      %v411 = vshrl.u32 %v410, 7
      %v412 = vsub.s32 0, %v411
      %v413 = vrot.slane %v408, %v412
      %v414 = vlaneseq
      %v415 = vshrl.u32 %v414, 7
      %v416 = vsub.s32 1, %v415
      %v417 = vrot.slane %v408, %v416
      %v426 = vunpack.c.l.b16 %v322
      %v427 = vunpack.c.h.b16 %v322
      %v428 = vunpack.c.l.b16 %v323
      %v429 = vunpack.c.h.b16 %v323
      %v430 = vunpack.c.l.b16 %v324
      %v431 = vunpack.c.h.b16 %v324
      %v432 = vunpack.c.l.b16 %v325
      %v433 = vunpack.c.h.b16 %v325
      %v434 = vunpack.c.l.b16 %v326
      %v435 = vunpack.c.h.b16 %v326
      %v436 = vunpack.c.l.b16 %v327
      %v437 = vunpack.c.h.b16 %v327
      %v438 = vpack.c.b16 %v430, %v426
      %v439 = vpack.c.b16 %v431, %v427
      %v440 = vpack.c.b16 %v432, %v428
      %v441 = vpack.c.b16 %v433, %v429
      %v442 = vpack.c.b16 %v434, %v434
      %v443 = vpack.c.b16 %v435, %v435
      %v444 = vpack.c.b16 %v436, %v436
      %v445 = vpack.c.b16 %v437, %v437
      %v518 = vunpack.c.l.b16 %v328
      %v519 = vunpack.c.h.b16 %v328
      %v520 = vunpack.c.l.b16 %v329
      %v521 = vunpack.c.h.b16 %v329
      %v522 = vunpack.c.l.b16 %v330
      %v523 = vunpack.c.h.b16 %v330
      %v524 = vunpack.c.l.b16 %v331
      %v525 = vunpack.c.h.b16 %v331
      %v526 = vunpack.c.l.b16 %v332
      %v527 = vunpack.c.h.b16 %v332
      %v528 = vunpack.c.l.b16 %v333
      %v529 = vunpack.c.h.b16 %v333
      %v530 = vunpack.c.l.b16 %v334
      %v531 = vunpack.c.h.b16 %v334
      %v532 = vunpack.c.l.b16 %v335
      %v533 = vunpack.c.h.b16 %v335
      %v534 = vunpack.c.l.b16 %v336
      %v535 = vunpack.c.h.b16 %v336
      %v536 = vunpack.c.l.b16 %v337
      %v537 = vunpack.c.h.b16 %v337
      %v538 = vunpack.c.l.b16 %v338
      %v539 = vunpack.c.h.b16 %v338
      %v540 = vunpack.c.l.b16 %v339
      %v541 = vunpack.c.h.b16 %v339
      %v542 = vunpack.c.l.b16 %v340
      %v543 = vunpack.c.h.b16 %v340
      %v544 = vunpack.c.l.b16 %v341
      %v545 = vunpack.c.h.b16 %v341
      %v546 = vunpack.c.l.b16 %v342
      %v547 = vunpack.c.h.b16 %v342
      %v548 = vunpack.c.l.b16 %v343
      %v549 = vunpack.c.h.b16 %v343
      %v550 = vunpack.c.l.b16 %v344
      %v551 = vunpack.c.h.b16 %v344
      %v552 = vunpack.c.l.b16 %v345
      %v553 = vunpack.c.h.b16 %v345
      %v554 = vunpack.c.l.b16 %v346
      %v555 = vunpack.c.h.b16 %v346
      %v556 = vunpack.c.l.b16 %v347
      %v557 = vunpack.c.h.b16 %v347
      %v558 = vunpack.c.l.b16 %v348
      %v559 = vunpack.c.h.b16 %v348
      %v560 = vunpack.c.l.b16 %v349
      %v561 = vunpack.c.h.b16 %v349
      %v562 = vunpack.c.l.b16 %v350
      %v563 = vunpack.c.h.b16 %v350
      %v564 = vunpack.c.l.b16 %v351
      %v565 = vunpack.c.h.b16 %v351
      %v566 = vunpack.c.l.b16 %v352
      %v567 = vunpack.c.h.b16 %v352
      %v568 = vunpack.c.l.b16 %v353
      %v569 = vunpack.c.h.b16 %v353
      %v570 = vunpack.c.l.b16 %v354
      %v571 = vunpack.c.h.b16 %v354
      %v572 = vunpack.c.l.b16 %v355
      %v573 = vunpack.c.h.b16 %v355
      %v574 = vunpack.c.l.b16 %v356
      %v575 = vunpack.c.h.b16 %v356
      %v576 = vunpack.c.l.b16 %v357
      %v577 = vunpack.c.h.b16 %v357
      %v578 = vunpack.c.l.b16 %v358
      %v579 = vunpack.c.h.b16 %v358
      %v580 = vunpack.c.l.b16 %v359
      %v581 = vunpack.c.h.b16 %v359
      %v582 = vunpack.c.l.b16 %v360
      %v583 = vunpack.c.h.b16 %v360
      %v584 = vunpack.c.l.b16 %v361
      %v585 = vunpack.c.h.b16 %v361
      %v586 = vunpack.c.l.b16 %v362
      %v587 = vunpack.c.h.b16 %v362
      %v588 = vunpack.c.l.b16 %v363
      %v589 = vunpack.c.h.b16 %v363
      %v590 = vunpack.c.l.b16 %v364
      %v591 = vunpack.c.h.b16 %v364
      %v592 = vunpack.c.l.b16 %v365
      %v593 = vunpack.c.h.b16 %v365
      %v594 = vunpack.c.l.b16 %v366
      %v595 = vunpack.c.h.b16 %v366
      %v596 = vunpack.c.l.b16 %v367
      %v597 = vunpack.c.h.b16 %v367
      %v598 = vunpack.c.l.b16 %v368
      %v599 = vunpack.c.h.b16 %v368
      %v600 = vunpack.c.l.b16 %v369
      %v601 = vunpack.c.h.b16 %v369
      %v602 = vunpack.c.l.b16 %v370
      %v603 = vunpack.c.h.b16 %v370
      %v604 = vunpack.c.l.b16 %v371
      %v605 = vunpack.c.h.b16 %v371
      %v606 = vunpack.c.l.b16 %v372
      %v607 = vunpack.c.h.b16 %v372
      %v608 = vunpack.c.l.b16 %v373
      %v609 = vunpack.c.h.b16 %v373
      %v610 = vunpack.c.l.b16 %v374
      %v611 = vunpack.c.h.b16 %v374
      %v612 = vunpack.c.l.b16 %v375
      %v613 = vunpack.c.h.b16 %v375
      %v614 = vunpack.c.l.b16 %v376
      %v615 = vunpack.c.h.b16 %v376
      %v616 = vunpack.c.l.b16 %v377
      %v617 = vunpack.c.h.b16 %v377
      %v618 = vunpack.c.l.b16 %v378
      %v619 = vunpack.c.h.b16 %v378
      %v620 = vunpack.c.l.b16 %v379
      %v621 = vunpack.c.h.b16 %v379
      %v622 = vunpack.c.l.b16 %v380
      %v623 = vunpack.c.h.b16 %v380
      %v624 = vunpack.c.l.b16 %v381
      %v625 = vunpack.c.h.b16 %v381
      %v626 = vunpack.c.l.b16 %v382
      %v627 = vunpack.c.h.b16 %v382
      %v628 = vunpack.c.l.b16 %v383
      %v629 = vunpack.c.h.b16 %v383
      %v630 = vunpack.c.l.b16 %v384
      %v631 = vunpack.c.h.b16 %v384
      %v632 = vunpack.c.l.b16 %v385
      %v633 = vunpack.c.h.b16 %v385
      %v634 = vunpack.c.l.b16 %v386
      %v635 = vunpack.c.h.b16 %v386
      %v636 = vunpack.c.l.b16 %v387
      %v637 = vunpack.c.h.b16 %v387
      %v638 = vunpack.c.l.b16 %v388
      %v639 = vunpack.c.h.b16 %v388
      %v640 = vunpack.c.l.b16 %v389
      %v641 = vunpack.c.h.b16 %v389
      %v642 = vunpack.c.l.b16 %v390
      %v643 = vunpack.c.h.b16 %v390
      %v644 = vunpack.c.l.b16 %v391
      %v645 = vunpack.c.h.b16 %v391
      %v646 = vpack.c.b16 %v520, %v518
      %v647 = vpack.c.b16 %v521, %v519
      %v648 = vpack.c.b16 %v524, %v522
      %v649 = vpack.c.b16 %v525, %v523
      %v650 = vpack.c.b16 %v528, %v526
      %v651 = vpack.c.b16 %v529, %v527
      %v652 = vpack.c.b16 %v532, %v530
      %v653 = vpack.c.b16 %v533, %v531
      %v654 = vpack.c.b16 %v536, %v534
      %v655 = vpack.c.b16 %v537, %v535
      %v656 = vpack.c.b16 %v540, %v538
      %v657 = vpack.c.b16 %v541, %v539
      %v658 = vpack.c.b16 %v544, %v542
      %v659 = vpack.c.b16 %v545, %v543
      %v660 = vpack.c.b16 %v548, %v546
      %v661 = vpack.c.b16 %v549, %v547
      %v662 = vpack.c.b16 %v552, %v550
      %v663 = vpack.c.b16 %v553, %v551
      %v664 = vpack.c.b16 %v556, %v554
      %v665 = vpack.c.b16 %v557, %v555
      %v666 = vpack.c.b16 %v560, %v558
      %v667 = vpack.c.b16 %v561, %v559
      %v668 = vpack.c.b16 %v564, %v562
      %v669 = vpack.c.b16 %v565, %v563
      %v670 = vpack.c.b16 %v568, %v566
      %v671 = vpack.c.b16 %v569, %v567
      %v672 = vpack.c.b16 %v572, %v570
      %v673 = vpack.c.b16 %v573, %v571
      %v674 = vpack.c.b16 %v576, %v574
      %v675 = vpack.c.b16 %v577, %v575
      %v676 = vpack.c.b16 %v580, %v578
      %v677 = vpack.c.b16 %v581, %v579
      %v678 = vpack.c.b16 %v584, %v582
      %v679 = vpack.c.b16 %v585, %v583
      %v680 = vpack.c.b16 %v588, %v586
      %v681 = vpack.c.b16 %v589, %v587
      %v682 = vpack.c.b16 %v592, %v590
      %v683 = vpack.c.b16 %v593, %v591
      %v684 = vpack.c.b16 %v596, %v594
      %v685 = vpack.c.b16 %v597, %v595
      %v686 = vpack.c.b16 %v600, %v598
      %v687 = vpack.c.b16 %v601, %v599
      %v688 = vpack.c.b16 %v604, %v602
      %v689 = vpack.c.b16 %v605, %v603
      %v690 = vpack.c.b16 %v608, %v606
      %v691 = vpack.c.b16 %v609, %v607
      %v692 = vpack.c.b16 %v612, %v610
      %v693 = vpack.c.b16 %v613, %v611
      %v694 = vpack.c.b16 %v616, %v614
      %v695 = vpack.c.b16 %v617, %v615
      %v696 = vpack.c.b16 %v620, %v618
      %v697 = vpack.c.b16 %v621, %v619
      %v698 = vpack.c.b16 %v624, %v622
      %v699 = vpack.c.b16 %v625, %v623
      %v700 = vpack.c.b16 %v628, %v626
      %v701 = vpack.c.b16 %v629, %v627
      %v702 = vpack.c.b16 %v632, %v630
      %v703 = vpack.c.b16 %v633, %v631
      %v704 = vpack.c.b16 %v636, %v634
      %v705 = vpack.c.b16 %v637, %v635
      %v706 = vpack.c.b16 %v640, %v638
      %v707 = vpack.c.b16 %v641, %v639
      %v708 = vpack.c.b16 %v644, %v642
      %v709 = vpack.c.b16 %v645, %v643
      %774 = vmatprep.subr.bf16.mxu0 %v647
      %775 = vmatpush1.bf16.msra.mxu0 %v646
      %776 = vmatprep.subr.bf16.mxu0 %v649
      %777 = vmatpush1.bf16.msra.mxu0 %v648
      %778 = vmatprep.subr.bf16.mxu0 %v651
      %779 = vmatpush1.bf16.msra.mxu0 %v650
      %780 = vmatprep.subr.bf16.mxu0 %v653
      %781 = vmatpush1.bf16.msra.mxu0 %v652
      %782 = vmatprep.subr.bf16.mxu0 %v655
      %783 = vmatpush1.bf16.msra.mxu0 %v654
      %784 = vmatprep.subr.bf16.mxu0 %v657
      %785 = vmatpush1.bf16.msra.mxu0 %v656
      %786 = vmatprep.subr.bf16.mxu0 %v659
      %787 = vmatpush1.bf16.msra.mxu0 %v658
      %788 = vmatprep.subr.bf16.mxu0 %v661
      %789 = vmatpush1.bf16.msra.mxu0 %v660
      %790 = vmatprep.subr.bf16.mxu0 %v663
      %791 = vmatpush1.bf16.msra.mxu0 %v662
      %792 = vmatprep.subr.bf16.mxu0 %v665
      %793 = vmatpush1.bf16.msra.mxu0 %v664
      %794 = vmatprep.subr.bf16.mxu0 %v667
      %795 = vmatpush1.bf16.msra.mxu0 %v666
      %796 = vmatprep.subr.bf16.mxu0 %v669
      %797 = vmatpush1.bf16.msra.mxu0 %v668
      %798 = vmatprep.subr.bf16.mxu0 %v671
      %799 = vmatpush1.bf16.msra.mxu0 %v670
      %800 = vmatprep.subr.bf16.mxu0 %v673
      %801 = vmatpush1.bf16.msra.mxu0 %v672
      %802 = vmatprep.subr.bf16.mxu0 %v675
      %803 = vmatpush1.bf16.msra.mxu0 %v674
      %804 = vmatprep.subr.bf16.mxu0 %v677
      %805 = vmatpush1.bf16.msra.mxu0 %v676
      %806 = vmatprep.mubr.bf16.mxu0 %v439
      %807 = vmatmul.mubr.bf16.gmra.mrb[0].mxu0 %v438
      %v808 = vpop.f32.mrb[0].mxu0
      %v809 = vadd.f32 %v413, %v808
      %v810 = vpop.f32.mrb[0].mxu0
      %v811 = vadd.f32 %v417, %v810
      %v812 = vpop.f32.mrb[0].mxu0
      %v813 = vadd.f32 %v413, %v812
      %v814 = vpop.f32.mrb[0].mxu0
      %v815 = vadd.f32 %v417, %v814
      %816 = vmatprep.mubr.bf16.mxu0 %v443
      %817 = vmatmul.mubr.bf16.gmra.mrb[0].mxu0 %v442
      %v818 = vpop.f32.mrb[0].mxu0
      %v819 = vadd.f32 %v413, %v818
      %v820 = vpop.f32.mrb[0].mxu0
      %v821 = vadd.f32 %v417, %v820
      %v822 = vpop.f32.mrb[0].mxu0
      %v823 = vpop.f32.mrb[0].mxu0
      %824 = vdwg.mxu0
      %825 = vmatprep.subr.bf16.mxu0 %v679
      %826 = vmatpush1.bf16.msra.mxu0 %v678
      %827 = vmatprep.subr.bf16.mxu0 %v681
      %828 = vmatpush1.bf16.msra.mxu0 %v680
      %829 = vmatprep.subr.bf16.mxu0 %v683
      %830 = vmatpush1.bf16.msra.mxu0 %v682
      %831 = vmatprep.subr.bf16.mxu0 %v685
      %832 = vmatpush1.bf16.msra.mxu0 %v684
      %833 = vmatprep.subr.bf16.mxu0 %v687
      %834 = vmatpush1.bf16.msra.mxu0 %v686
      %835 = vmatprep.subr.bf16.mxu0 %v689
      %836 = vmatpush1.bf16.msra.mxu0 %v688
      %837 = vmatprep.subr.bf16.mxu0 %v691
      %838 = vmatpush1.bf16.msra.mxu0 %v690
      %839 = vmatprep.subr.bf16.mxu0 %v693
      %840 = vmatpush1.bf16.msra.mxu0 %v692
      %841 = vmatprep.subr.bf16.mxu0 %v695
      %842 = vmatpush1.bf16.msra.mxu0 %v694
      %843 = vmatprep.subr.bf16.mxu0 %v697
      %844 = vmatpush1.bf16.msra.mxu0 %v696
      %845 = vmatprep.subr.bf16.mxu0 %v699
      %846 = vmatpush1.bf16.msra.mxu0 %v698
      %847 = vmatprep.subr.bf16.mxu0 %v701
      %848 = vmatpush1.bf16.msra.mxu0 %v700
      %849 = vmatprep.subr.bf16.mxu0 %v703
      %850 = vmatpush1.bf16.msra.mxu0 %v702
      %851 = vmatprep.subr.bf16.mxu0 %v705
      %852 = vmatpush1.bf16.msra.mxu0 %v704
      %853 = vmatprep.subr.bf16.mxu0 %v707
      %854 = vmatpush1.bf16.msra.mxu0 %v706
      %855 = vmatprep.subr.bf16.mxu0 %v709
      %856 = vmatpush1.bf16.msra.mxu0 %v708
      %857 = vmatprep.mubr.bf16.mxu0 %v441
      %858 = vmatmul.mubr.bf16.gmra.mrb[0].mxu0 %v440
      %v859 = vpop.f32.mrb[0].mxu0
      %v860 = vadd.f32 %v809, %v859
      %v861 = vpop.f32.mrb[0].mxu0
      %v862 = vadd.f32 %v811, %v861
      %v863 = vpop.f32.mrb[0].mxu0
      %v864 = vadd.f32 %v813, %v863
      %v865 = vpop.f32.mrb[0].mxu0
      %v866 = vadd.f32 %v815, %v865
      %867 = vmatprep.mubr.bf16.mxu0 %v445
      %868 = vmatmul.mubr.bf16.gmra.mrb[0].mxu0 %v444
      %v869 = vpop.f32.mrb[0].mxu0
      %v870 = vadd.f32 %v819, %v869
      %v871 = vpop.f32.mrb[0].mxu0
      %v872 = vadd.f32 %v821, %v871
      %v873 = vpop.f32.mrb[0].mxu0
      %v874 = vpop.f32.mrb[0].mxu0
      %875 = vdwg.mxu0
      %876 = vst [vmem:[#allocation4] sm:$0xff] %v860
      %vm877 = vcmask 523264
      %878 = vst.msk [vmem:[#allocation4 + $0x8] sm:$0xff] %vm877, %v862
      %879 = vst [vmem:[#allocation4 + $0x10] sm:$0xff] %v864
      %880 = vst.msk [vmem:[#allocation4 + $0x18] sm:$0xff] %vm877, %v866
      %881 = vst [vmem:[#allocation4 + $0x20] sm:$0xf] %v870
      %vm882 = vcmask 519168
      %883 = vst.msk [vmem:[#allocation4 + $0x28] sm:$0xf] %vm882, %v872
      %v884 = vld [vmem:[#allocation4] sm:$0xff]
      %v885 = vld [vmem:[#allocation4 + $0x10] sm:$0x3]
      %v886 = vpack.c.bf16 %v885, %v884
      %v887 = vld [vmem:[#allocation4 + $0x8] sm:$0xff]
      %v888 = vld [vmem:[#allocation4 + $0x18] sm:$0x3]
      %v889 = vpack.c.bf16 %v888, %v887
      %891 = vrot.lane.b32.xlu0 %v886, 64
      %v892 = vpop.permute.xlu0 %891
      %v894 = vsel %vm877, %v886, 0
      %v897 = vsel %vm877, %v892, 0
      %899 = vmatprep.subr.bf16.mxu0 0
      %900 = vmatpush1.bf16.xpose.msra.mxu0 %v897
      %901 = vmatprep.subr.bf16.mxu0 0
      %902 = vmatpush1.bf16.xpose.msra.mxu0 0
      %903 = vmatprep.subr.bf16.mxu0 0
      %904 = vmatpush1.bf16.xpose.msra.mxu0 0
      %905 = vmatprep.subr.bf16.mxu0 0
      %906 = vmatpush1.bf16.xpose.msra.mxu0 0
      %907 = vmatprep.subr.bf16.mxu0 0
      %908 = vmatpush1.bf16.xpose.msra.mxu0 0
      %909 = vmatprep.subr.bf16.mxu0 0
      %910 = vmatpush1.bf16.xpose.msra.mxu0 0
      %911 = vmatprep.subr.bf16.mxu0 0
      %912 = vmatpush1.bf16.xpose.msra.mxu0 0
      %913 = vmatprep.subr.bf16.mxu0 0
      %914 = vmatpush1.bf16.xpose.msra.mxu0 0
      %915 = vmatprep.subr.bf16.mxu0 0
      %916 = vmatpush1.bf16.xpose.msra.mxu0 0
      %917 = vmatprep.subr.bf16.mxu0 0
      %918 = vmatpush1.bf16.xpose.msra.mxu0 0
      %919 = vmatprep.subr.bf16.mxu0 0
      %920 = vmatpush1.bf16.xpose.msra.mxu0 0
      %921 = vmatprep.subr.bf16.mxu0 0
      %922 = vmatpush1.bf16.xpose.msra.mxu0 0
      %923 = vmatprep.subr.bf16.mxu0 0
      %924 = vmatpush1.bf16.xpose.msra.mxu0 0
      %925 = vmatprep.subr.bf16.mxu0 0
      %926 = vmatpush1.bf16.xpose.msra.mxu0 0
      %927 = vmatprep.subr.bf16.mxu0 0
      %928 = vmatpush1.bf16.xpose.msra.mxu0 0
      %929 = vmatprep.subr.bf16.mxu0 0
      %930 = vmatpush1.bf16.xpose.msra.mxu0 0
      %931 = vmatprep.mubr.bf16.mxu0 0
      %932 = vmatmul.mubr.bf16.gmra.mrb[0].mxu0 %v894
      %v933 = vpop.f32.mrb[0].mxu0
      %v934 = vadd.f32 0.0, %v933
      %v935 = vpop.f32.mrb[0].mxu0
      %v936 = vpop.f32.mrb[0].mxu0
      %v937 = vadd.f32 0.0, %v936
      %v938 = vpop.f32.mrb[0].mxu0
      %939 = vdwg.mxu0
      %v940 = vmul.f32 %v934, 0.125
      %v941 = vmul.f32 %v937, 0.125
      %vm942 = vcmask 80896
      %v943 = vsel %vm942, %v940, -inf
      %944 = vmax.xlane.f32.xlu0 %v943
      %v945 = vpop.xlane.xlu0 %944
      %vm946 = vcmask 74752
      %v947 = vsel %vm946, %v941, -inf
      %948 = vmax.xlane.f32.xlu0 %v947
      %v949 = vpop.xlane.xlu0 %948
      %v950 = vsub.f32 %v940, %v945
      %v951 = vsub.f32 %v941, %v949
      %v952 = vmul.f32 %v950, 1.442695
      %v953 = vpow.pop %v952
      %v954 = vmul.f32 %v951, 1.442695
      %v955 = vpow.pop %v954
      %v956 = vsel %vm942, %v953, 0.0
      %957 = vadd.xlane.f32.xlu0 %v956
      %v958 = vpop.xlane.xlu0 %957
      %v959 = vsel %vm946, %v955, 0.0
      %960 = vadd.xlane.f32.xlu0 %v959
      %v961 = vpop.xlane.xlu0 %960
      %v962 = vrcp.pop %v958
      %v963 = vrcp.pop %v961
      %v964 = vmul.f32 %v953, %v962
      %v965 = vmul.f32 %v955, %v963
      %v966 = vpack.c.bf16 %v965, %v964
      %v968 = vsel %vm942, %v966, 0
      %vm970 = vcmask 1044480
      %v972 = vsel %vm970, %v889, 0
      %974 = vmatprep.subr.bf16.mxu0 0
      %975 = vmatpush1.bf16.msra.mxu0 %v972
      %976 = vmatprep.subr.bf16.mxu0 0
      %977 = vmatpush1.bf16.msra.mxu0 0
      %978 = vmatprep.subr.bf16.mxu0 0
      %979 = vmatpush1.bf16.msra.mxu0 0
      %980 = vmatprep.subr.bf16.mxu0 0
      %981 = vmatpush1.bf16.msra.mxu0 0
      %982 = vmatprep.subr.bf16.mxu0 0
      %983 = vmatpush1.bf16.msra.mxu0 0
      %984 = vmatprep.subr.bf16.mxu0 0
      %985 = vmatpush1.bf16.msra.mxu0 0
      %986 = vmatprep.subr.bf16.mxu0 0
      %987 = vmatpush1.bf16.msra.mxu0 0
      %988 = vmatprep.subr.bf16.mxu0 0
      %989 = vmatpush1.bf16.msra.mxu0 0
      %990 = vmatprep.subr.bf16.mxu0 0
      %991 = vmatpush1.bf16.msra.mxu0 0
      %992 = vmatprep.subr.bf16.mxu0 0
      %993 = vmatpush1.bf16.msra.mxu0 0
      %994 = vmatprep.subr.bf16.mxu0 0
      %995 = vmatpush1.bf16.msra.mxu0 0
      %996 = vmatprep.subr.bf16.mxu0 0
      %997 = vmatpush1.bf16.msra.mxu0 0
      %998 = vmatprep.subr.bf16.mxu0 0
      %999 = vmatpush1.bf16.msra.mxu0 0
      %1000 = vmatprep.subr.bf16.mxu0 0
      %1001 = vmatpush1.bf16.msra.mxu0 0
      %1002 = vmatprep.subr.bf16.mxu0 0
      %1003 = vmatpush1.bf16.msra.mxu0 0
      %1004 = vmatprep.subr.bf16.mxu0 0
      %1005 = vmatpush1.bf16.msra.mxu0 0
      %1006 = vmatprep.mubr.bf16.mxu0 0
      %1007 = vmatmul.mubr.bf16.gmra.mrb[0].mxu0 %v968
      %v1008 = vpop.f32.mrb[0].mxu0
      %v1009 = vadd.f32 0.0, %v1008
      %v1010 = vpop.f32.mrb[0].mxu0
      %v1011 = vpop.f32.mrb[0].mxu0
      %v1012 = vadd.f32 0.0, %v1011
      %v1013 = vpop.f32.mrb[0].mxu0
      %1014 = vdwg.mxu0
      %v1015 = vld [vmem:[#allocation2] sm:$0xff]
      %v1016 = vld [vmem:[#allocation2 + $0x8] sm:$0xff]
      %v1017 = vld [vmem:[#allocation2 + $0x10] sm:$0xff]
      %v1018 = vld [vmem:[#allocation2 + $0x18] sm:$0xff]
      %v1019 = vld [vmem:[#allocation2 + $0x20] sm:$0x3]
      %v1020 = vld [vmem:[#allocation2 + $0x28] sm:$0x3]
      %v1021 = vld [vmem:[#allocation2 + $0x30] sm:$0x3]
      %v1022 = vld [vmem:[#allocation2 + $0x38] sm:$0x3]
      %v1023 = vpack.c.bf16 %v1012, %v1009
      %v1040 = vunpack.c.l.b16 %v392
      %v1041 = vunpack.c.h.b16 %v392
      %v1042 = vunpack.c.l.b16 %v393
      %v1043 = vunpack.c.h.b16 %v393
      %v1044 = vunpack.c.l.b16 %v394
      %v1045 = vunpack.c.h.b16 %v394
      %v1046 = vunpack.c.l.b16 %v395
      %v1047 = vunpack.c.h.b16 %v395
      %v1048 = vunpack.c.l.b16 %v396
      %v1049 = vunpack.c.h.b16 %v396
      %v1050 = vunpack.c.l.b16 %v397
      %v1051 = vunpack.c.h.b16 %v397
      %v1052 = vunpack.c.l.b16 %v398
      %v1053 = vunpack.c.h.b16 %v398
      %v1054 = vunpack.c.l.b16 %v399
      %v1055 = vunpack.c.h.b16 %v399
      %v1056 = vunpack.c.l.b16 %v400
      %v1057 = vunpack.c.h.b16 %v400
      %v1058 = vunpack.c.l.b16 %v401
      %v1059 = vunpack.c.h.b16 %v401
      %v1060 = vunpack.c.l.b16 %v402
      %v1061 = vunpack.c.h.b16 %v402
      %v1062 = vunpack.c.l.b16 %v403
      %v1063 = vunpack.c.h.b16 %v403
      %v1064 = vunpack.c.l.b16 %v404
      %v1065 = vunpack.c.h.b16 %v404
      %v1066 = vunpack.c.l.b16 %v405
      %v1067 = vunpack.c.h.b16 %v405
      %v1068 = vunpack.c.l.b16 %v406
      %v1069 = vunpack.c.h.b16 %v406
      %v1070 = vunpack.c.l.b16 %v407
      %v1071 = vunpack.c.h.b16 %v407
      %v1072 = vpack.c.b16 %v1044, %v1040
      %v1073 = vpack.c.b16 %v1045, %v1041
      %v1074 = vpack.c.b16 %v1046, %v1042
      %v1075 = vpack.c.b16 %v1047, %v1043
      %v1076 = vpack.c.b16 %v1052, %v1048
      %v1077 = vpack.c.b16 %v1053, %v1049
      %v1078 = vpack.c.b16 %v1054, %v1050
      %v1079 = vpack.c.b16 %v1055, %v1051
      %v1080 = vpack.c.b16 %v1060, %v1056
      %v1081 = vpack.c.b16 %v1061, %v1057
      %v1082 = vpack.c.b16 %v1062, %v1058
      %v1083 = vpack.c.b16 %v1063, %v1059
      %v1084 = vpack.c.b16 %v1068, %v1064
      %v1085 = vpack.c.b16 %v1069, %v1065
      %v1086 = vpack.c.b16 %v1070, %v1066
      %v1087 = vpack.c.b16 %v1071, %v1067
      %v1105 = vsel %vm877, %v1023, 0
      %1107 = vmatprep.subr.bf16.mxu0 %v1073
      %1108 = vmatpush1.bf16.msra.mxu0 %v1072
      %1109 = vmatprep.subr.bf16.mxu0 %v1077
      %1110 = vmatpush1.bf16.msra.mxu0 %v1076
      %1111 = vmatprep.subr.bf16.mxu0 %v1081
      %1112 = vmatpush1.bf16.msra.mxu0 %v1080
      %1113 = vmatprep.subr.bf16.mxu0 %v1085
      %1114 = vmatpush1.bf16.msra.mxu0 %v1084
      %1115 = vmatprep.subr.bf16.mxu0 0
      %1116 = vmatpush1.bf16.msra.mxu0 0
      %1117 = vmatprep.subr.bf16.mxu0 0
      %1118 = vmatpush1.bf16.msra.mxu0 0
      %1119 = vmatprep.subr.bf16.mxu0 0
      %1120 = vmatpush1.bf16.msra.mxu0 0
      %1121 = vmatprep.subr.bf16.mxu0 0
      %1122 = vmatpush1.bf16.msra.mxu0 0
      %1123 = vmatprep.subr.bf16.mxu0 0
      %1124 = vmatpush1.bf16.msra.mxu0 0
      %1125 = vmatprep.subr.bf16.mxu0 0
      %1126 = vmatpush1.bf16.msra.mxu0 0
      %1127 = vmatprep.subr.bf16.mxu0 0
      %1128 = vmatpush1.bf16.msra.mxu0 0
      %1129 = vmatprep.subr.bf16.mxu0 0
      %1130 = vmatpush1.bf16.msra.mxu0 0
      %1131 = vmatprep.subr.bf16.mxu0 0
      %1132 = vmatpush1.bf16.msra.mxu0 0
      %1133 = vmatprep.subr.bf16.mxu0 0
      %1134 = vmatpush1.bf16.msra.mxu0 0
      %1135 = vmatprep.subr.bf16.mxu0 0
      %1136 = vmatpush1.bf16.msra.mxu0 0
      %1137 = vmatprep.subr.bf16.mxu0 0
      %1138 = vmatpush1.bf16.msra.mxu0 0
      %1139 = vmatprep.mubr.bf16.mxu0 0
      %1140 = vmatmul.mubr.bf16.gmra.mrb[0].mxu0 %v1105
      %v1141 = vpop.f32.mrb[0].mxu0
      %v1142 = vadd.f32 0.0, %v1141
      %v1143 = vpop.f32.mrb[0].mxu0
      %v1144 = vadd.f32 0.0, %v1143
      %v1145 = vpop.f32.mrb[0].mxu0
      %v1146 = vadd.f32 0.0, %v1145
      %v1147 = vpop.f32.mrb[0].mxu0
      %v1148 = vadd.f32 0.0, %v1147
      %1149 = vdwg.mxu0
      %1150 = vmatprep.subr.bf16.mxu0 %v1075
      %1151 = vmatpush1.bf16.msra.mxu0 %v1074
      %1152 = vmatprep.subr.bf16.mxu0 %v1079
      %1153 = vmatpush1.bf16.msra.mxu0 %v1078
      %1154 = vmatprep.subr.bf16.mxu0 %v1083
      %1155 = vmatpush1.bf16.msra.mxu0 %v1082
      %1156 = vmatprep.subr.bf16.mxu0 %v1087
      %1157 = vmatpush1.bf16.msra.mxu0 %v1086
      %1158 = vmatprep.subr.bf16.mxu0 0
      %1159 = vmatpush1.bf16.msra.mxu0 0
      %1160 = vmatprep.subr.bf16.mxu0 0
      %1161 = vmatpush1.bf16.msra.mxu0 0
      %1162 = vmatprep.subr.bf16.mxu0 0
      %1163 = vmatpush1.bf16.msra.mxu0 0
      %1164 = vmatprep.subr.bf16.mxu0 0
      %1165 = vmatpush1.bf16.msra.mxu0 0
      %1166 = vmatprep.subr.bf16.mxu0 0
      %1167 = vmatpush1.bf16.msra.mxu0 0
      %1168 = vmatprep.subr.bf16.mxu0 0
      %1169 = vmatpush1.bf16.msra.mxu0 0
      %1170 = vmatprep.subr.bf16.mxu0 0
      %1171 = vmatpush1.bf16.msra.mxu0 0
      %1172 = vmatprep.subr.bf16.mxu0 0
      %1173 = vmatpush1.bf16.msra.mxu0 0
      %1174 = vmatprep.subr.bf16.mxu0 0
      %1175 = vmatpush1.bf16.msra.mxu0 0
      %1176 = vmatprep.subr.bf16.mxu0 0
      %1177 = vmatpush1.bf16.msra.mxu0 0
      %1178 = vmatprep.subr.bf16.mxu0 0
      %1179 = vmatpush1.bf16.msra.mxu0 0
      %1180 = vmatprep.subr.bf16.mxu0 0
      %1181 = vmatpush1.bf16.msra.mxu0 0
      %1182 = vmatprep.mubr.bf16.mxu0 0
      %1183 = vmatmul.mubr.bf16.gmra.mrb[0].mxu0 %v1105
      %v1184 = vpop.f32.mrb[0].mxu0
      %v1185 = vadd.f32 0.0, %v1184
      %v1186 = vpop.f32.mrb[0].mxu0
      %v1187 = vadd.f32 0.0, %v1186
      %v1188 = vpop.f32.mrb[0].mxu0
      %v1189 = vadd.f32 0.0, %v1188
      %v1190 = vpop.f32.mrb[0].mxu0
      %v1191 = vadd.f32 0.0, %v1190
      %1192 = vdwg.mxu0
      %v1193 = vadd.f32 %v1015, %v1142
      %v1194 = vadd.f32 %v1016, %v1144
      %v1195 = vadd.f32 %v1017, %v1185
      %v1196 = vadd.f32 %v1018, %v1187
      %v1197 = vadd.f32 %v1019, %v1146
      %v1198 = vadd.f32 %v1020, %v1148
      %v1199 = vadd.f32 %v1021, %v1189
      %v1200 = vadd.f32 %v1022, %v1191
      %1201 = vst [vmem:[#allocation2] sm:$0xff] %v1193
      %1202 = vst [vmem:[#allocation2 + $0x8] sm:$0xff] %v1194
      %1203 = vst [vmem:[#allocation2 + $0x10] sm:$0xff] %v1195
      %1204 = vst [vmem:[#allocation2 + $0x18] sm:$0xff] %v1196
      %1205 = vst [vmem:[#allocation2 + $0x20] sm:$0x3] %v1197
      %1206 = vst [vmem:[#allocation2 + $0x28] sm:$0x3] %v1198
      %1207 = vst [vmem:[#allocation2 + $0x30] sm:$0x3] %v1199
      %1208 = vst [vmem:[#allocation2 + $0x38] sm:$0x3] %v1200
      %v1209 = vld [vmem:[#allocation4 + $0x10] sm:$0xfc]
      %v1210 = vld [vmem:[#allocation4 + $0x20] sm:$0xf]
      %v1211 = vpack.c.bf16 %v1210, %v1209
      %v1212 = vld [vmem:[#allocation4 + $0x18] sm:$0xfc]
      %v1213 = vld [vmem:[#allocation4 + $0x28] sm:$0xf]
      %v1214 = vpack.c.bf16 %v1213, %v1212
      %v1216 = vrot.slane %v1211, 1
      %1217 = vrot.lane.b32.xlu0 %v1216, 64
      %v1218 = vpop.permute.xlu0 %1217
      %v1220 = vsel %vm877, %v1216, 0
      %v1223 = vsel %vm877, %v1218, 0
      %1225 = vmatprep.subr.bf16.mxu0 0
      %1226 = vmatpush1.bf16.xpose.msra.mxu0 %v1223
      %1227 = vmatprep.subr.bf16.mxu0 0
      %1228 = vmatpush1.bf16.xpose.msra.mxu0 0
      %1229 = vmatprep.subr.bf16.mxu0 0
      %1230 = vmatpush1.bf16.xpose.msra.mxu0 0
      %1231 = vmatprep.subr.bf16.mxu0 0
      %1232 = vmatpush1.bf16.xpose.msra.mxu0 0
      %1233 = vmatprep.subr.bf16.mxu0 0
      %1234 = vmatpush1.bf16.xpose.msra.mxu0 0
      %1235 = vmatprep.subr.bf16.mxu0 0
      %1236 = vmatpush1.bf16.xpose.msra.mxu0 0
      %1237 = vmatprep.subr.bf16.mxu0 0
      %1238 = vmatpush1.bf16.xpose.msra.mxu0 0
      %1239 = vmatprep.subr.bf16.mxu0 0
      %1240 = vmatpush1.bf16.xpose.msra.mxu0 0
      %1241 = vmatprep.subr.bf16.mxu0 0
      %1242 = vmatpush1.bf16.xpose.msra.mxu0 0
      %1243 = vmatprep.subr.bf16.mxu0 0
      %1244 = vmatpush1.bf16.xpose.msra.mxu0 0
      %1245 = vmatprep.subr.bf16.mxu0 0
      %1246 = vmatpush1.bf16.xpose.msra.mxu0 0
      %1247 = vmatprep.subr.bf16.mxu0 0
      %1248 = vmatpush1.bf16.xpose.msra.mxu0 0
      %1249 = vmatprep.subr.bf16.mxu0 0
      %1250 = vmatpush1.bf16.xpose.msra.mxu0 0
      %1251 = vmatprep.subr.bf16.mxu0 0
      %1252 = vmatpush1.bf16.xpose.msra.mxu0 0
      %1253 = vmatprep.subr.bf16.mxu0 0
      %1254 = vmatpush1.bf16.xpose.msra.mxu0 0
      %1255 = vmatprep.subr.bf16.mxu0 0
      %1256 = vmatpush1.bf16.xpose.msra.mxu0 0
      %1257 = vmatprep.mubr.bf16.mxu0 0
      %1258 = vmatmul.mubr.bf16.gmra.mrb[0].mxu0 %v1220
      %v1259 = vpop.f32.mrb[0].mxu0
      %v1260 = vadd.f32 0.0, %v1259
      %v1261 = vpop.f32.mrb[0].mxu0
      %v1262 = vpop.f32.mrb[0].mxu0
      %v1263 = vadd.f32 0.0, %v1262
      %v1264 = vpop.f32.mrb[0].mxu0
      %1265 = vdwg.mxu0
      %v1266 = vmul.f32 %v1260, 0.125
      %v1267 = vmul.f32 %v1263, 0.125
      %v1268 = vsel %vm942, %v1266, -inf
      %1269 = vmax.xlane.f32.xlu0 %v1268
      %v1270 = vpop.xlane.xlu0 %1269
      %v1271 = vsel %vm946, %v1267, -inf
      %1272 = vmax.xlane.f32.xlu0 %v1271
      %v1273 = vpop.xlane.xlu0 %1272
      %v1274 = vsub.f32 %v1266, %v1270
      %v1275 = vsub.f32 %v1267, %v1273
      %v1276 = vmul.f32 %v1274, 1.442695
      %v1277 = vpow.pop %v1276
      %v1278 = vmul.f32 %v1275, 1.442695
      %v1279 = vpow.pop %v1278
      %v1280 = vsel %vm942, %v1277, 0.0
      %1281 = vadd.xlane.f32.xlu0 %v1280
      %v1282 = vpop.xlane.xlu0 %1281
      %v1283 = vsel %vm946, %v1279, 0.0
      %1284 = vadd.xlane.f32.xlu0 %v1283
      %v1285 = vpop.xlane.xlu0 %1284
      %v1286 = vrcp.pop %v1282
      %v1287 = vrcp.pop %v1285
      %v1288 = vmul.f32 %v1277, %v1286
      %v1289 = vmul.f32 %v1279, %v1287
      %v1290 = vpack.c.bf16 %v1289, %v1288
      %v1292 = vrot.slane %v1214, 1
      %v1294 = vsel %vm942, %v1290, 0
      %v1297 = vsel %vm970, %v1292, 0
      %1299 = vmatprep.subr.bf16.mxu0 0
      %1300 = vmatpush1.bf16.msra.mxu0 %v1297
      %1301 = vmatprep.subr.bf16.mxu0 0
      %1302 = vmatpush1.bf16.msra.mxu0 0
      %1303 = vmatprep.subr.bf16.mxu0 0
      %1304 = vmatpush1.bf16.msra.mxu0 0
      %1305 = vmatprep.subr.bf16.mxu0 0
      %1306 = vmatpush1.bf16.msra.mxu0 0
      %1307 = vmatprep.subr.bf16.mxu0 0
      %1308 = vmatpush1.bf16.msra.mxu0 0
      %1309 = vmatprep.subr.bf16.mxu0 0
      %1310 = vmatpush1.bf16.msra.mxu0 0
      %1311 = vmatprep.subr.bf16.mxu0 0
      %1312 = vmatpush1.bf16.msra.mxu0 0
      %1313 = vmatprep.subr.bf16.mxu0 0
      %1314 = vmatpush1.bf16.msra.mxu0 0
      %1315 = vmatprep.subr.bf16.mxu0 0
      %1316 = vmatpush1.bf16.msra.mxu0 0
      %1317 = vmatprep.subr.bf16.mxu0 0
      %1318 = vmatpush1.bf16.msra.mxu0 0
      %1319 = vmatprep.subr.bf16.mxu0 0
      %1320 = vmatpush1.bf16.msra.mxu0 0
      %1321 = vmatprep.subr.bf16.mxu0 0
      %1322 = vmatpush1.bf16.msra.mxu0 0
      %1323 = vmatprep.subr.bf16.mxu0 0
      %1324 = vmatpush1.bf16.msra.mxu0 0
      %1325 = vmatprep.subr.bf16.mxu0 0
      %1326 = vmatpush1.bf16.msra.mxu0 0
      %1327 = vmatprep.subr.bf16.mxu0 0
      %1328 = vmatpush1.bf16.msra.mxu0 0
      %1329 = vmatprep.subr.bf16.mxu0 0
      %1330 = vmatpush1.bf16.msra.mxu0 0
      %1331 = vmatprep.mubr.bf16.mxu0 0
      %1332 = vmatmul.mubr.bf16.gmra.mrb[0].mxu0 %v1294
      %v1333 = vpop.f32.mrb[0].mxu0
      %v1334 = vadd.f32 0.0, %v1333
      %v1335 = vpop.f32.mrb[0].mxu0
      %v1336 = vpop.f32.mrb[0].mxu0
      %v1337 = vadd.f32 0.0, %v1336
      %v1338 = vpop.f32.mrb[0].mxu0
      %1339 = vdwg.mxu0
      %v1340 = vld [vmem:[#allocation2 + $0x20] sm:$0xfc]
      %v1341 = vld [vmem:[#allocation2 + $0x28] sm:$0xfc]
      %v1342 = vld [vmem:[#allocation2 + $0x30] sm:$0xfc]
      %v1343 = vld [vmem:[#allocation2 + $0x38] sm:$0xfc]
      %v1344 = vld [vmem:[#allocation2 + $0x40] sm:$0xf]
      %v1345 = vld [vmem:[#allocation2 + $0x48] sm:$0xf]
      %v1346 = vld [vmem:[#allocation2 + $0x50] sm:$0xf]
      %v1347 = vld [vmem:[#allocation2 + $0x58] sm:$0xf]
      %v1348 = vpack.c.bf16 %v1337, %v1334
      %v1350 = vsel %vm877, %v1348, 0
      %1352 = vmatprep.subr.bf16.mxu0 %v1073
      %1353 = vmatpush1.bf16.msra.mxu0 %v1072
      %1354 = vmatprep.subr.bf16.mxu0 %v1077
      %1355 = vmatpush1.bf16.msra.mxu0 %v1076
      %1356 = vmatprep.subr.bf16.mxu0 %v1081
      %1357 = vmatpush1.bf16.msra.mxu0 %v1080
      %1358 = vmatprep.subr.bf16.mxu0 %v1085
      %1359 = vmatpush1.bf16.msra.mxu0 %v1084
      %1360 = vmatprep.subr.bf16.mxu0 0
      %1361 = vmatpush1.bf16.msra.mxu0 0
      %1362 = vmatprep.subr.bf16.mxu0 0
      %1363 = vmatpush1.bf16.msra.mxu0 0
      %1364 = vmatprep.subr.bf16.mxu0 0
      %1365 = vmatpush1.bf16.msra.mxu0 0
      %1366 = vmatprep.subr.bf16.mxu0 0
      %1367 = vmatpush1.bf16.msra.mxu0 0
      %1368 = vmatprep.subr.bf16.mxu0 0
      %1369 = vmatpush1.bf16.msra.mxu0 0
      %1370 = vmatprep.subr.bf16.mxu0 0
      %1371 = vmatpush1.bf16.msra.mxu0 0
      %1372 = vmatprep.subr.bf16.mxu0 0
      %1373 = vmatpush1.bf16.msra.mxu0 0
      %1374 = vmatprep.subr.bf16.mxu0 0
      %1375 = vmatpush1.bf16.msra.mxu0 0
      %1376 = vmatprep.subr.bf16.mxu0 0
      %1377 = vmatpush1.bf16.msra.mxu0 0
      %1378 = vmatprep.subr.bf16.mxu0 0
      %1379 = vmatpush1.bf16.msra.mxu0 0
      %1380 = vmatprep.subr.bf16.mxu0 0
      %1381 = vmatpush1.bf16.msra.mxu0 0
      %1382 = vmatprep.subr.bf16.mxu0 0
      %1383 = vmatpush1.bf16.msra.mxu0 0
      %1384 = vmatprep.mubr.bf16.mxu0 0
      %1385 = vmatmul.mubr.bf16.gmra.mrb[0].mxu0 %v1350
      %v1386 = vpop.f32.mrb[0].mxu0
      %v1387 = vadd.f32 0.0, %v1386
      %v1388 = vpop.f32.mrb[0].mxu0
      %v1389 = vadd.f32 0.0, %v1388
      %v1390 = vpop.f32.mrb[0].mxu0
      %v1391 = vadd.f32 0.0, %v1390
      %v1392 = vpop.f32.mrb[0].mxu0
      %v1393 = vadd.f32 0.0, %v1392
      %1394 = vdwg.mxu0
      %1395 = vmatprep.subr.bf16.mxu0 %v1075
      %1396 = vmatpush1.bf16.msra.mxu0 %v1074
      %1397 = vmatprep.subr.bf16.mxu0 %v1079
      %1398 = vmatpush1.bf16.msra.mxu0 %v1078
      %1399 = vmatprep.subr.bf16.mxu0 %v1083
      %1400 = vmatpush1.bf16.msra.mxu0 %v1082
      %1401 = vmatprep.subr.bf16.mxu0 %v1087
      %1402 = vmatpush1.bf16.msra.mxu0 %v1086
      %1403 = vmatprep.subr.bf16.mxu0 0
      %1404 = vmatpush1.bf16.msra.mxu0 0
      %1405 = vmatprep.subr.bf16.mxu0 0
      %1406 = vmatpush1.bf16.msra.mxu0 0
      %1407 = vmatprep.subr.bf16.mxu0 0
      %1408 = vmatpush1.bf16.msra.mxu0 0
      %1409 = vmatprep.subr.bf16.mxu0 0
      %1410 = vmatpush1.bf16.msra.mxu0 0
      %1411 = vmatprep.subr.bf16.mxu0 0
      %1412 = vmatpush1.bf16.msra.mxu0 0
      %1413 = vmatprep.subr.bf16.mxu0 0
      %1414 = vmatpush1.bf16.msra.mxu0 0
      %1415 = vmatprep.subr.bf16.mxu0 0
      %1416 = vmatpush1.bf16.msra.mxu0 0
      %1417 = vmatprep.subr.bf16.mxu0 0
      %1418 = vmatpush1.bf16.msra.mxu0 0
      %1419 = vmatprep.subr.bf16.mxu0 0
      %1420 = vmatpush1.bf16.msra.mxu0 0
      %1421 = vmatprep.subr.bf16.mxu0 0
      %1422 = vmatpush1.bf16.msra.mxu0 0
      %1423 = vmatprep.subr.bf16.mxu0 0
      %1424 = vmatpush1.bf16.msra.mxu0 0
      %1425 = vmatprep.subr.bf16.mxu0 0
      %1426 = vmatpush1.bf16.msra.mxu0 0
      %1427 = vmatprep.mubr.bf16.mxu0 0
      %1428 = vmatmul.mubr.bf16.gmra.mrb[0].mxu0 %v1350
      %v1429 = vpop.f32.mrb[0].mxu0
      %v1430 = vadd.f32 0.0, %v1429
      %v1431 = vpop.f32.mrb[0].mxu0
      %v1432 = vadd.f32 0.0, %v1431
      %v1433 = vpop.f32.mrb[0].mxu0
      %v1434 = vadd.f32 0.0, %v1433
      %v1435 = vpop.f32.mrb[0].mxu0
      %v1436 = vadd.f32 0.0, %v1435
      %1437 = vdwg.mxu0
      %vm1446 = vcmask 1041408
      %v1447 = vrot.slane %v1387, 6
      %v1448 = vrot.slane %v1389, 6
      %v1449 = vrot.slane %v1430, 6
      %v1450 = vrot.slane %v1432, 6
      %v1451 = vrot.slane %v1391, 6
      %v1452 = vsel %vm1446, %v1447, %v1451
      %v1453 = vrot.slane %v1393, 6
      %v1454 = vsel %vm1446, %v1448, %v1453
      %v1455 = vrot.slane %v1434, 6
      %v1456 = vsel %vm1446, %v1449, %v1455
      %v1457 = vrot.slane %v1436, 6
      %v1458 = vsel %vm1446, %v1450, %v1457
      %v1467 = vadd.f32 %v1340, %v1447
      %v1468 = vadd.f32 %v1341, %v1448
      %v1469 = vadd.f32 %v1342, %v1449
      %v1470 = vadd.f32 %v1343, %v1450
      %v1471 = vadd.f32 %v1344, %v1452
      %v1472 = vadd.f32 %v1345, %v1454
      %v1473 = vadd.f32 %v1346, %v1456
      %v1474 = vadd.f32 %v1347, %v1458
      %1475 = vst [vmem:[#allocation2 + $0x20] sm:$0xfc] %v1467
      %1476 = vst [vmem:[#allocation2 + $0x28] sm:$0xfc] %v1468
      %1477 = vst [vmem:[#allocation2 + $0x30] sm:$0xfc] %v1469
      %1478 = vst [vmem:[#allocation2 + $0x38] sm:$0xfc] %v1470
      %1479 = vst [vmem:[#allocation2 + $0x40] sm:$0xf] %v1471
      %1480 = vst [vmem:[#allocation2 + $0x48] sm:$0xf] %v1472
      %1481 = vst [vmem:[#allocation2 + $0x50] sm:$0xf] %v1473
      %1482 = vst [vmem:[#allocation2 + $0x58] sm:$0xf] %v1474
      %p1483 = scmp.eq.s32.totalorder %s16, 7
      // Predicated region
      $region45: #{multi_head_self_attention.1} parent=39 // pred_check
        %p1484 = pneg %p1483
      $region46: #{multi_head_self_attention.1} parent=39 // pred_check_branch
        %1486 = sbr.rel (%p1484) target = $region48
      $region47: #{multi_head_self_attention.1} parent=39 // pred_region
        %v1487 = vld [vmem:[#allocation2] sm:$0xff]
        %v1488 = vld [vmem:[#allocation2 + $0x8] sm:$0xff]
        %v1489 = vld [vmem:[#allocation2 + $0x10] sm:$0xff]
        %v1490 = vld [vmem:[#allocation2 + $0x18] sm:$0xff]
        %v1491 = vld [vmem:[#allocation2 + $0x20] sm:$0xff]
        %v1492 = vld [vmem:[#allocation2 + $0x28] sm:$0xff]
        %v1493 = vld [vmem:[#allocation2 + $0x30] sm:$0xff]
        %v1494 = vld [vmem:[#allocation2 + $0x38] sm:$0xff]
        %v1495 = vld [vmem:[#allocation2 + $0x40] sm:$0xf]
        %v1496 = vld [vmem:[#allocation2 + $0x48] sm:$0xf]
        %v1497 = vld [vmem:[#allocation2 + $0x50] sm:$0xf]
        %v1498 = vld [vmem:[#allocation2 + $0x58] sm:$0xf]
        %v1499 = vld [vmem:[%s4] sm:$0xf]
        %v1501 = vlaneseq
        %v1502 = vshrl.u32 %v1501, 7
        %v1503 = vsub.s32 0, %v1502
        %v1504 = vrot.slane %v1499, %v1503
        %v1505 = vlaneseq
        %v1506 = vshrl.u32 %v1505, 7
        %v1507 = vsub.s32 1, %v1506
        %v1508 = vrot.slane %v1499, %v1507
        %v1509 = vlaneseq
        %v1510 = vshrl.u32 %v1509, 7
        %v1511 = vsub.s32 2, %v1510
        %v1512 = vrot.slane %v1499, %v1511
        %v1513 = vlaneseq
        %v1514 = vshrl.u32 %v1513, 7
        %v1515 = vsub.s32 3, %v1514
        %v1516 = vrot.slane %v1499, %v1515
        %v1521 = vadd.f32 %v1487, %v1504
        %v1522 = vadd.f32 %v1488, %v1508
        %v1523 = vadd.f32 %v1489, %v1512
        %v1524 = vadd.f32 %v1490, %v1516
        %v1525 = vadd.f32 %v1491, %v1504
        %v1526 = vadd.f32 %v1492, %v1508
        %v1527 = vadd.f32 %v1493, %v1512
        %v1528 = vadd.f32 %v1494, %v1516
        %v1529 = vadd.f32 %v1495, %v1504
        %v1530 = vadd.f32 %v1496, %v1508
        %v1531 = vadd.f32 %v1497, %v1512
        %v1532 = vadd.f32 %v1498, %v1516
        %1533 = vst [vmem:[%s5] sm:$0xff] %v1521
        %1534 = vst [vmem:[%s5 + $0x8] sm:$0xff] %v1522
        %1535 = vst [vmem:[%s5 + $0x10] sm:$0xff] %v1523
        %1536 = vst [vmem:[%s5 + $0x18] sm:$0xff] %v1524
        %1537 = vst [vmem:[%s5 + $0x20] sm:$0xff] %v1525
        %1538 = vst [vmem:[%s5 + $0x28] sm:$0xff] %v1526
        %1539 = vst [vmem:[%s5 + $0x30] sm:$0xff] %v1527
        %1540 = vst [vmem:[%s5 + $0x38] sm:$0xff] %v1528
        %1541 = vst [vmem:[%s5 + $0x40] sm:$0xf] %v1529
        %1542 = vst [vmem:[%s5 + $0x48] sm:$0xf] %v1530
        %1543 = vst [vmem:[%s5 + $0x50] sm:$0xf] %v1531
        %1544 = vst [vmem:[%s5 + $0x58] sm:$0xf] %v1532
      $region48: #{multi_head_self_attention.1} parent=39 // pred_fallthru
        _
      // Predicated region
      $region49: #{multi_head_self_attention.1} parent=39 // pred_check
        %p1545 = pneg %p149
      $region50: #{multi_head_self_attention.1} parent=39 // pred_check_branch
        %1547 = sbr.rel (%p1545) target = $region52
      $region51: #{multi_head_self_attention.1} parent=39 // pred_region
        _
      $region52: #{multi_head_self_attention.1} parent=39 // pred_fallthru
        _
      // Predicated region
      $region53: #{multi_head_self_attention.1} parent=39 // pred_check
        %p1548 = pneg %p149
      $region54: #{multi_head_self_attention.1} parent=39 // pred_check_branch
        %1550 = sbr.rel (%p1548) target = $region56
      $region55: #{multi_head_self_attention.1} parent=39 // pred_region
        _
      $region56: #{multi_head_self_attention.1} parent=39 // pred_fallthru
        _
    $region40: #{multi_head_self_attention.1} parent=5 // pred_fallthru
      _
    %p1551 = scmp.le.s32.totalorder 2, %s11
    // Predicated region
    $region57: #{multi_head_self_attention.1} parent=5 // pred_check
      %p1552 = pneg %p1551
    $region58: #{multi_head_self_attention.1} parent=5 // pred_check_branch
      %1554 = sbr.rel (%p1552) target = $region60
    $region59: #{multi_head_self_attention.1} parent=5 // pred_region
      %s1555 = ssub.s32 %s11, 2
    $region60: #{multi_head_self_attention.1} parent=5 // pred_fallthru
      _
  $region6: #{multi_head_self_attention.1} parent=0 // loop_footer
    %s15 = sadd.s32 1, %s11
  $region7: #{multi_head_self_attention.1} parent=0 // loop_footer_branch
    %10 = sbr.rel target = $region3
  $region8: #{multi_head_self_attention.1} parent=0 // loop_exit
    _

</llo_original>
